<compile_context>
chip_gen: v7x
topology: tpu7x:2x2x1
jax: 0.10.0
libtpu: 0.0.40
codegen_flags: <defaults>
</compile_context>

<pallas_src>
import math
import functools

import jax
import jax.numpy as jnp
from jax.experimental import pallas as pl
from jax.experimental.pallas import tpu as pltpu


def _periodic_kernel(c_ref, s_ref, p_ref, q_ref, b_ref, o_ref):
    # c_ref, s_ref:          (TB, I)   cos(omega*x), sin(omega*x) batch tiles
    # p_ref, q_ref, b_ref:   (TO, I)   A*cos(phi), A*sin(phi), bias tiles
    # o_ref:                 (TB, TO, I)
    c = c_ref[...][:, None, :]                       # (TB, 1, I)
    s = s_ref[...][:, None, :]
    p = p_ref[...][None, :, :]                       # (1, TO, I)
    q = q_ref[...][None, :, :]
    b = b_ref[...][None, :, :]
    # A*cos(omega*x + phi) + bias == P*cos(omega*x) - Q*sin(omega*x) + bias
    o_ref[...] = (p * c - q * s + b).astype(o_ref.dtype)


def _vmem_budget_and_limit():
    """Generation-aware VMEM sizing (128 MiB on v5e/v6e, 64 MiB per TC on v7x)."""
    try:
        vmem = pltpu.get_tpu_info().vmem_capacity_bytes
    except Exception:
        vmem = 64 * 1024 * 1024                      # conservative (v7x per-TC)
    budget = min(int(vmem * 0.45), 56 * 1024 * 1024)  # in-flight blocks + temporaries
    limit = min(int(vmem * 0.75), 96 * 1024 * 1024)   # compiler scoped-VMEM cap
    return budget, limit


def _choose_block_b(B, cap=64):
    """Largest multiple-of-8 divisor of B that is <= cap; full B if none exists.

    Second-to-last block dims must be a multiple of 8 (f32 sublane) or equal the
    full dim — never return e.g. 50 for B=100.
    """
    if B % 8 != 0:
        return B
    best = 8
    c = 8
    while c <= min(B, cap):
        if B % c == 0:
            best = c
        c += 8
    return best


def _choose_block_out(B, O, I, block_b, budget_bytes, dtype_bytes=4):
    """Largest O-tile whose in-flight VMEM (incl. output-sized temporaries) fits."""
    cands = sorted(
        {c for c in (O, 4096, 2048, 1024, 512, 256, 128, 64, 32, 16, 8)
         if c <= O and O % c == 0 and (c % 8 == 0 or c == O)},
        reverse=True)
    for c in cands:
        out_blk = block_b * c * I * dtype_bytes
        par_blk = 3 * c * I * dtype_bytes
        cs_blk = 2 * block_b * I * dtype_bytes
        # 2x double-buffered DMA blocks + ~2 output-sized elementwise temporaries.
        inflight = 2 * (out_blk + par_blk + cs_blk) + 2 * out_blk
        if inflight <= budget_bytes:
            return c
    return cands[-1] if cands else O


@functools.partial(jax.jit, static_argnames=("block_b", "block_out", "vmem_limit"))
def _periodic_pallas(x, omega, weight_A, weight_phi, bias,
                     *, block_b, block_out, vmem_limit):
    B, I = x.shape
    O, _ = weight_A.shape

    # TODO(synk): for inference with static weights, hoist P/Q out of the per-call
    # path (precompute once) to save an extra XLA elementwise pass per forward.
    P = weight_A * jnp.cos(weight_phi)
    Q = weight_A * jnp.sin(weight_phi)
    # Transcendentals hoisted out of the kernel: tiny (B, I) arrays.
    ox = omega[None, :] * x
    c = jnp.cos(ox)
    s = jnp.sin(ox)

    # Pad the lane dim to a multiple of 128 so output stores stay unmasked.
    I_pad = ((I + 127) // 128) * 128
    if I_pad != I:
        pad = [(0, 0), (0, I_pad - I)]
        c, s, P, Q, bias = (jnp.pad(a, pad) for a in (c, s, P, Q, bias))

    # Out-tiles OUTER, batch-tiles INNER: P/Q/bias block index is invariant across
    # the inner loop, so the parameter slab is DMA'd from HBM only once per O-tile.
    grid = (O // block_out, B // block_b)

    cost = pl.CostEstimate(
        flops=4 * B * O * I_pad,
        transcendentals=0,
        bytes_accessed=(B * O * I_pad + 3 * O * I_pad + 2 * B * I_pad) * 4,
    )

    out = pl.pallas_call(
        _periodic_kernel,
        out_shape=jax.ShapeDtypeStruct((B, O, I_pad), x.dtype),
        grid_spec=pltpu.PrefetchScalarGridSpec(
            num_scalar_prefetch=0,
            grid=grid,
            in_specs=[
                pl.BlockSpec((block_b, I_pad), lambda n, b: (b, 0)),    # cos(omega*x)
                pl.BlockSpec((block_b, I_pad), lambda n, b: (b, 0)),    # sin(omega*x)
                pl.BlockSpec((block_out, I_pad), lambda n, b: (n, 0)),  # P = A*cos(phi)
                pl.BlockSpec((block_out, I_pad), lambda n, b: (n, 0)),  # Q = A*sin(phi)
                pl.BlockSpec((block_out, I_pad), lambda n, b: (n, 0)),  # bias
            ],
            out_specs=pl.BlockSpec((block_b, block_out, I_pad),
                                   lambda n, b: (b, n, 0)),
        ),
        compiler_params=pltpu.CompilerParams(
            dimension_semantics=("parallel", "parallel"),
            vmem_limit_bytes=vmem_limit,
        ),
        cost_estimate=cost,
    )(c, s, P, Q, bias)

    if I_pad != I:
        out = out[:, :, :I]
    return out


def periodic_forward(x, omega, weight_A, weight_phi, bias,
                     *, block_b=None, block_out=None):
    B, I = x.shape
    O, _ = weight_A.shape
    budget, limit = _vmem_budget_and_limit()
    if block_b is None:
        block_b = _choose_block_b(B)
    if block_out is None:
        block_out = _choose_block_out(B, O, I, block_b, budget)
    assert B % block_b == 0 and O % block_out == 0
    return _periodic_pallas(x, omega, weight_A, weight_phi, bias,
                            block_b=block_b, block_out=block_out,
                            vmem_limit=limit)


def periodic_reference(x, omega, weight_A, weight_phi, bias):
    # Plain-JAX reference mirroring the PyTorch forward exactly.
    arg = omega[None, None, :] * x[:, None, :] + weight_phi[None, :, :]
    return weight_A[None, :, :] * jnp.cos(arg) + bias[None, :, :]


if __name__ == "__main__":
    # Module hyperparameters (small, lane-aligned).
    in_features = 128
    node = 4
    out_features = node * in_features
    batch = 8

    key = jax.random.PRNGKey(0)
    k_x, k_A, k_phi, k_b = jax.random.split(key, 4)

    # Deterministic init mirroring the PyTorch __init__:
    #   kaiming_uniform_(a=sqrt(5)) on (O, I)  ->  U(-1/sqrt(fan_in), 1/sqrt(fan_in))
    fan_in = in_features
    bound = 1.0 / math.sqrt(fan_in)
    weight_A = jax.random.uniform(k_A, (out_features, in_features),
                                  minval=-bound, maxval=bound, dtype=jnp.float32)
    weight_phi = jax.random.uniform(k_phi, (out_features, in_features),
                                    minval=-bound, maxval=bound, dtype=jnp.float32)
    bias = jax.random.uniform(k_b, (out_features, in_features),
                              minval=-bound, maxval=bound, dtype=jnp.float32)

    # period is a Tensor in the module; use a per-feature period, omega = 2*pi/period.
    period = 1.0 + jnp.arange(in_features, dtype=jnp.float32) / in_features
    omega = 2.0 * math.pi / period                     # shape (in_features,)

    x = jax.random.uniform(k_x, (batch, in_features),
                           minval=-1.0, maxval=1.0, dtype=jnp.float32)

    out = periodic_forward(x, omega, weight_A, weight_phi, bias)
    out = jax.block_until_ready(out)

    ref = periodic_reference(x, omega, weight_A, weight_phi, bias)
    assert out.shape == (batch, out_features, in_features)
    assert jnp.allclose(out, ref, atol=1e-5, rtol=1e-5)

    print("KERNEL_OK")
</pallas_src>

<mosaic_0001>
module attributes {stable_mosaic.version = 11 : i64} {
  func.func @_periodic_kernel(%arg0: i32, %arg1: i32, %arg2: memref<8x128xf32, #tpu.memory_space<vmem>>, %arg3: memref<8x128xf32, #tpu.memory_space<vmem>>, %arg4: memref<512x128xf32, #tpu.memory_space<vmem>>, %arg5: memref<512x128xf32, #tpu.memory_space<vmem>>, %arg6: memref<512x128xf32, #tpu.memory_space<vmem>>, %arg7: memref<8x512x128xf32, #tpu.memory_space<vmem>>) attributes {dimension_semantics = [#tpu.dimension_semantics<parallel>, #tpu.dimension_semantics<parallel>], iteration_bounds = array<i64: 1, 1>, scalar_prefetch = 0 : i64, scratch_operands = 0 : i64, tpu.core_type = #tpu.core_type<tc>, window_params = [{transform_indices = @transform_0, window_bounds = array<i64: 8, 128>}, {transform_indices = @transform_1, window_bounds = array<i64: 8, 128>}, {transform_indices = @transform_2, window_bounds = array<i64: 512, 128>}, {transform_indices = @transform_3, window_bounds = array<i64: 512, 128>}, {transform_indices = @transform_4, window_bounds = array<i64: 512, 128>}, {transform_indices = @transform_5, window_bounds = array<i64: 8, 512, 128>}]} {
    %c0 = arith.constant 0 : index
    %c0_0 = arith.constant 0 : index
    %0 = vector.load %arg2[%c0, %c0_0] : memref<8x128xf32, #tpu.memory_space<vmem>>, vector<8x128xf32>
    %1 = vector.shape_cast %0 : vector<8x128xf32> to vector<8x1x128xf32>
    %c0_1 = arith.constant 0 : index
    %c0_2 = arith.constant 0 : index
    %2 = vector.load %arg3[%c0_1, %c0_2] : memref<8x128xf32, #tpu.memory_space<vmem>>, vector<8x128xf32>
    %3 = vector.shape_cast %2 : vector<8x128xf32> to vector<8x1x128xf32>
    %c0_3 = arith.constant 0 : index
    %c0_4 = arith.constant 0 : index
    %4 = vector.load %arg4[%c0_3, %c0_4] : memref<512x128xf32, #tpu.memory_space<vmem>>, vector<512x128xf32>
    %5 = vector.shape_cast %4 : vector<512x128xf32> to vector<1x512x128xf32>
    %c0_5 = arith.constant 0 : index
    %c0_6 = arith.constant 0 : index
    %6 = vector.load %arg5[%c0_5, %c0_6] : memref<512x128xf32, #tpu.memory_space<vmem>>, vector<512x128xf32>
    %7 = vector.shape_cast %6 : vector<512x128xf32> to vector<1x512x128xf32>
    %c0_7 = arith.constant 0 : index
    %c0_8 = arith.constant 0 : index
    %8 = vector.load %arg6[%c0_7, %c0_8] : memref<512x128xf32, #tpu.memory_space<vmem>>, vector<512x128xf32>
    %9 = vector.shape_cast %8 : vector<512x128xf32> to vector<1x512x128xf32>
    %10 = vector.broadcast %5 : vector<1x512x128xf32> to vector<8x512x128xf32>
    %11 = vector.broadcast %1 : vector<8x1x128xf32> to vector<8x512x128xf32>
    %12 = arith.mulf %10, %11 : vector<8x512x128xf32>
    %13 = vector.broadcast %7 : vector<1x512x128xf32> to vector<8x512x128xf32>
    %14 = vector.broadcast %3 : vector<8x1x128xf32> to vector<8x512x128xf32>
    %15 = arith.mulf %13, %14 : vector<8x512x128xf32>
    %16 = arith.subf %12, %15 : vector<8x512x128xf32>
    %17 = vector.broadcast %9 : vector<1x512x128xf32> to vector<8x512x128xf32>
    %18 = arith.addf %16, %17 : vector<8x512x128xf32>
    %c0_9 = arith.constant 0 : index
    %c0_10 = arith.constant 0 : index
    %c0_11 = arith.constant 0 : index
    %19 = vector.load %arg7[%c0_9, %c0_10, %c0_11] : memref<8x512x128xf32, #tpu.memory_space<vmem>>, vector<8x512x128xf32>
    tpu.vector_store %arg7[%c0_9, %c0_10, %c0_11], %18 {strides = array<i32>} : memref<8x512x128xf32, #tpu.memory_space<vmem>>, vector<8x512x128xf32>,
    return
  }
  func.func @transform_0(%arg0: i32, %arg1: i32) -> (i32, i32) {
    %c0_i32 = arith.constant 0 : i32
    %c0_i32_0 = arith.constant 0 : i32
    return %arg1, %c0_i32 : i32, i32
  }
  func.func @transform_1(%arg0: i32, %arg1: i32) -> (i32, i32) {
    %c0_i32 = arith.constant 0 : i32
    %c0_i32_0 = arith.constant 0 : i32
    return %arg1, %c0_i32 : i32, i32
  }
  func.func @transform_2(%arg0: i32, %arg1: i32) -> (i32, i32) {
    %c0_i32 = arith.constant 0 : i32
    %c0_i32_0 = arith.constant 0 : i32
    return %arg0, %c0_i32 : i32, i32
  }
  func.func @transform_3(%arg0: i32, %arg1: i32) -> (i32, i32) {
    %c0_i32 = arith.constant 0 : i32
    %c0_i32_0 = arith.constant 0 : i32
    return %arg0, %c0_i32 : i32, i32
  }
  func.func @transform_4(%arg0: i32, %arg1: i32) -> (i32, i32) {
    %c0_i32 = arith.constant 0 : i32
    %c0_i32_0 = arith.constant 0 : i32
    return %arg0, %c0_i32 : i32, i32
  }
  func.func @transform_5(%arg0: i32, %arg1: i32) -> (i32, i32, i32) {
    %c0_i32 = arith.constant 0 : i32
    %c0_i32_0 = arith.constant 0 : i32
    return %arg1, %arg0, %c0_i32 : i32, i32, i32
  }
}

</mosaic_0001>

<llo_original>
// kernel: _periodic_pallas.1
$region0: #{_periodic_pallas.1}
  #allocation0 [shape = 'u32[]', space=smem, size = 0x4, offset = 0x4, fixed_abs, tag = 'smem constant byte address 0x4 - core index']
  #allocation1 [shape = 'u32[144,128]{1,0:T(1,128)}', space=vmem, size = 0x12000, scoped, tag = 'internal scratch']
  %s0 = inlined_call_operand.vmem [shape: f32[8,128], index: 0, kind: input, shape index: {}]
  %s1 = inlined_call_operand.vmem [shape: f32[8,128], index: 1, kind: input, shape index: {}]
  %s2 = inlined_call_operand.vmem [shape: f32[512,128], index: 2, kind: input, shape index: {}]
  %s3 = inlined_call_operand.vmem [shape: f32[512,128], index: 3, kind: input, shape index: {}]
  %s4 = inlined_call_operand.hbm [shape: f32[512,128], index: 4, kind: input, shape index: {}]
  %s5 = inlined_call_operand.hbm [shape: f32[8,512,128], index: 5, kind: output, shape index: {}]
  %s6 = sld [smem:[#allocation0]]
  $region34: #{_periodic_pallas.1} parent=0
    _
  %s8 = ssub.s32 1, %s6
  %s9 = scalar_select 0, %s8, %s6
  $region1: #{_periodic_pallas.1} parent=0
    #allocation2 [shape = 'u8[262144]{0}', space=vmem, size = 0x40000, scoped, tag = 'input window, operand 4, single buffered']
    #allocation3 [shape = 's32[1]{0}', space=sflag, size = 0x4, scoped, tag = 'scoped memory for _periodic_pallas.1']
    #allocation4 [shape = 's32[1]{0}', space=sflag, size = 0x4, scoped, tag = 'scoped memory for _periodic_pallas.1']
    #allocation5 [shape = 'u8[2097152]{0}', space=vmem, size = 0x200000, scoped, tag = 'output window, operand 0, single buffered']
    %10 = vsyncpa [#allocation3], 0
    %11 = vsyncpa [#allocation4], 0
    // Predicated region
    $region2: #{_periodic_pallas.1} parent=1 // pred_check
      _
    $region3: #{_periodic_pallas.1} parent=1 // pred_check_branch
      %13 = sbr.rel (0) target = $region5
    $region4: #{_periodic_pallas.1} parent=1 // pred_region
      _
    $region5: #{_periodic_pallas.1} parent=1 // pred_fallthru
      _
    // Predicated region
    $region6: #{_periodic_pallas.1} parent=1 // pred_check
      _
    $region7: #{_periodic_pallas.1} parent=1 // pred_check_branch
      %15 = sbr.rel (0) target = $region9
    $region8: #{_periodic_pallas.1} parent=1 // pred_region
      _
    $region9: #{_periodic_pallas.1} parent=1 // pred_fallthru
      _
    // Predicated region
    $region10: #{_periodic_pallas.1} parent=1 // pred_check
      _
    $region11: #{_periodic_pallas.1} parent=1 // pred_check_branch
      %17 = sbr.rel (0) target = $region13
    $region12: #{_periodic_pallas.1} parent=1 // pred_region
      _
    $region13: #{_periodic_pallas.1} parent=1 // pred_fallthru
      _
    // Predicated region
    $region14: #{_periodic_pallas.1} parent=1 // pred_check
      _
    $region15: #{_periodic_pallas.1} parent=1 // pred_check_branch
      %19 = sbr.rel (0) target = $region17
    $region16: #{_periodic_pallas.1} parent=1 // pred_region
      _
    $region17: #{_periodic_pallas.1} parent=1 // pred_fallthru
      _
    // Predicated region
    $region18: #{_periodic_pallas.1} parent=1 // pred_check
      _
    $region19: #{_periodic_pallas.1} parent=1 // pred_check_branch
      %21 = sbr.rel (0) target = $region21
    $region20: #{_periodic_pallas.1} parent=1 // pred_region
      %s23 = ssub.s32 8192, 8192
      %24 = vsyncadd [#allocation3], %s23
      %s25 = sshll.u32 [#allocation2], 4
      %s26 = int_to_ptr.vmem [resolvable:$true] %s25
      %31 = dma.hbm_to_vmem [thread:$0]  %s4, 8192, %s26, [#allocation3], 128, 128, 8
    $region21: #{_periodic_pallas.1} parent=1 // pred_fallthru
      _
    // Predicated region
    $region22: #{_periodic_pallas.1} parent=1 // pred_check
      _
    $region23: #{_periodic_pallas.1} parent=1 // pred_check_branch
      %33 = sbr.rel (0) target = $region25
    $region24: #{_periodic_pallas.1} parent=1 // pred_region
      %34 = dma.done [#allocation3], 8192
    $region25: #{_periodic_pallas.1} parent=1 // pred_fallthru
      _
    %v35 = vld [vmem:[%s0] sm:$0xff]
    %v37 = vcombine.high %v35, %v35
    %v39 = vunpack.c.l.s4 1966171168
    %v40 = vunpack.c.0.s8 %v39
    %v41 = vlaneseq
    %v42 = vshrl.u32 %v41, 7
    %v43 = vsub.s32 %v40, %v42
    %v44 = vrot.slane %v35, %v43
    %v46 = vunpack.c.l.s4 1966171168
    %v47 = vunpack.c.0.s8 %v46
    %v48 = vlaneseq
    %v49 = vshrl.u32 %v48, 7
    %v50 = vsub.s32 %v47, %v49
    %v51 = vrot.slane %v37, %v50
    %v52 = vcombine.high %v44, %v44
    %v53 = vcombine.high %v51, %v51
    %v55 = vunpack.c.l.s4 1966171168
    %v56 = vunpack.c.0.s8 %v55
    %v57 = vlaneseq
    %v58 = vshrl.u32 %v57, 7
    %v59 = vsub.s32 %v56, %v58
    %v60 = vrot.slane %v44, %v59
    %v62 = vunpack.c.l.s4 1966171168
    %v63 = vunpack.c.0.s8 %v62
    %v64 = vlaneseq
    %v65 = vshrl.u32 %v64, 7
    %v66 = vsub.s32 %v63, %v65
    %v67 = vrot.slane %v51, %v66
    %v69 = vunpack.c.l.s4 1966171168
    %v70 = vunpack.c.0.s8 %v69
    %v71 = vlaneseq
    %v72 = vshrl.u32 %v71, 7
    %v73 = vsub.s32 %v70, %v72
    %v74 = vrot.slane %v52, %v73
    %v76 = vunpack.c.l.s4 1966171168
    %v77 = vunpack.c.0.s8 %v76
    %v78 = vlaneseq
    %v79 = vshrl.u32 %v78, 7
    %v80 = vsub.s32 %v77, %v79
    %v81 = vrot.slane %v53, %v80
    %v82 = vcombine.high %v60, %v60
    %v83 = vcombine.high %v67, %v67
    %v84 = vcombine.high %v74, %v74
    %v85 = vcombine.high %v81, %v81
    %v86 = vld [vmem:[%s1] sm:$0xff]
    %v88 = vcombine.high %v86, %v86
    %v90 = vunpack.c.l.s4 1966171168
    %v91 = vunpack.c.0.s8 %v90
    %v92 = vlaneseq
    %v93 = vshrl.u32 %v92, 7
    %v94 = vsub.s32 %v91, %v93
    %v95 = vrot.slane %v86, %v94
    %v97 = vunpack.c.l.s4 1966171168
    %v98 = vunpack.c.0.s8 %v97
    %v99 = vlaneseq
    %v100 = vshrl.u32 %v99, 7
    %v101 = vsub.s32 %v98, %v100
    %v102 = vrot.slane %v88, %v101
    %v103 = vcombine.high %v95, %v95
    %v104 = vcombine.high %v102, %v102
    %v106 = vunpack.c.l.s4 1966171168
    %v107 = vunpack.c.0.s8 %v106
    %v108 = vlaneseq
    %v109 = vshrl.u32 %v108, 7
    %v110 = vsub.s32 %v107, %v109
    %v111 = vrot.slane %v95, %v110
    %v113 = vunpack.c.l.s4 1966171168
    %v114 = vunpack.c.0.s8 %v113
    %v115 = vlaneseq
    %v116 = vshrl.u32 %v115, 7
    %v117 = vsub.s32 %v114, %v116
    %v118 = vrot.slane %v102, %v117
    %v120 = vunpack.c.l.s4 1966171168
    %v121 = vunpack.c.0.s8 %v120
    %v122 = vlaneseq
    %v123 = vshrl.u32 %v122, 7
    %v124 = vsub.s32 %v121, %v123
    %v125 = vrot.slane %v103, %v124
    %v127 = vunpack.c.l.s4 1966171168
    %v128 = vunpack.c.0.s8 %v127
    %v129 = vlaneseq
    %v130 = vshrl.u32 %v129, 7
    %v131 = vsub.s32 %v128, %v130
    %v132 = vrot.slane %v104, %v131
    %v133 = vcombine.high %v111, %v111
    %v134 = vcombine.high %v118, %v118
    %v135 = vcombine.high %v125, %v125
    %v136 = vcombine.high %v132, %v132
    %v137 = vld [vmem:[%s2] sm:$0xff]
    %v138 = vld [vmem:[%s2 + $0x8] sm:$0xff]
    %v139 = vld [vmem:[%s2 + $0x10] sm:$0xff]
    %v140 = vld [vmem:[%s2 + $0x18] sm:$0xff]
    %v141 = vld [vmem:[%s2 + $0x20] sm:$0xff]
    %v142 = vld [vmem:[%s2 + $0x28] sm:$0xff]
    %v143 = vld [vmem:[%s2 + $0x30] sm:$0xff]
    %v144 = vld [vmem:[%s2 + $0x38] sm:$0xff]
    %v145 = vld [vmem:[%s2 + $0x40] sm:$0xff]
    %v146 = vld [vmem:[%s2 + $0x48] sm:$0xff]
    %v147 = vld [vmem:[%s2 + $0x50] sm:$0xff]
    %v148 = vld [vmem:[%s2 + $0x58] sm:$0xff]
    %v149 = vld [vmem:[%s2 + $0x60] sm:$0xff]
    %v150 = vld [vmem:[%s2 + $0x68] sm:$0xff]
    %v151 = vld [vmem:[%s2 + $0x70] sm:$0xff]
    %v152 = vld [vmem:[%s2 + $0x78] sm:$0xff]
    %v153 = vld [vmem:[%s2 + $0x80] sm:$0xff]
    %v154 = vld [vmem:[%s2 + $0x88] sm:$0xff]
    %v155 = vld [vmem:[%s2 + $0x90] sm:$0xff]
    %v156 = vld [vmem:[%s2 + $0x98] sm:$0xff]
    %v157 = vld [vmem:[%s2 + $0xa0] sm:$0xff]
    %v158 = vld [vmem:[%s2 + $0xa8] sm:$0xff]
    %v159 = vld [vmem:[%s2 + $0xb0] sm:$0xff]
    %v160 = vld [vmem:[%s2 + $0xb8] sm:$0xff]
    %v161 = vld [vmem:[%s2 + $0xc0] sm:$0xff]
    %v162 = vld [vmem:[%s2 + $0xc8] sm:$0xff]
    %v163 = vld [vmem:[%s2 + $0xd0] sm:$0xff]
    %v164 = vld [vmem:[%s2 + $0xd8] sm:$0xff]
    %v165 = vld [vmem:[%s2 + $0xe0] sm:$0xff]
    %v166 = vld [vmem:[%s2 + $0xe8] sm:$0xff]
    %v167 = vld [vmem:[%s2 + $0xf0] sm:$0xff]
    %v168 = vld [vmem:[%s2 + $0xf8] sm:$0xff]
    %v169 = vld [vmem:[%s2 + $0x100] sm:$0xff]
    %v170 = vld [vmem:[%s2 + $0x108] sm:$0xff]
    %v171 = vld [vmem:[%s2 + $0x110] sm:$0xff]
    %v172 = vld [vmem:[%s2 + $0x118] sm:$0xff]
    %v173 = vld [vmem:[%s2 + $0x120] sm:$0xff]
    %v174 = vld [vmem:[%s2 + $0x128] sm:$0xff]
    %v175 = vld [vmem:[%s2 + $0x130] sm:$0xff]
    %v176 = vld [vmem:[%s2 + $0x138] sm:$0xff]
    %v177 = vld [vmem:[%s2 + $0x140] sm:$0xff]
    %v178 = vld [vmem:[%s2 + $0x148] sm:$0xff]
    %v179 = vld [vmem:[%s2 + $0x150] sm:$0xff]
    %v180 = vld [vmem:[%s2 + $0x158] sm:$0xff]
    %v181 = vld [vmem:[%s2 + $0x160] sm:$0xff]
    %v182 = vld [vmem:[%s2 + $0x168] sm:$0xff]
    %v183 = vld [vmem:[%s2 + $0x170] sm:$0xff]
    %v184 = vld [vmem:[%s2 + $0x178] sm:$0xff]
    %v185 = vld [vmem:[%s2 + $0x180] sm:$0xff]
    %v186 = vld [vmem:[%s2 + $0x188] sm:$0xff]
    %v187 = vld [vmem:[%s2 + $0x190] sm:$0xff]
    %v188 = vld [vmem:[%s2 + $0x198] sm:$0xff]
    %v189 = vld [vmem:[%s2 + $0x1a0] sm:$0xff]
    %v190 = vld [vmem:[%s2 + $0x1a8] sm:$0xff]
    %v191 = vld [vmem:[%s2 + $0x1b0] sm:$0xff]
    %v192 = vld [vmem:[%s2 + $0x1b8] sm:$0xff]
    %v193 = vld [vmem:[%s2 + $0x1c0] sm:$0xff]
    %v194 = vld [vmem:[%s2 + $0x1c8] sm:$0xff]
    %v195 = vld [vmem:[%s2 + $0x1d0] sm:$0xff]
    %v196 = vld [vmem:[%s2 + $0x1d8] sm:$0xff]
    %v197 = vld [vmem:[%s2 + $0x1e0] sm:$0xff]
    %v198 = vld [vmem:[%s2 + $0x1e8] sm:$0xff]
    %v199 = vld [vmem:[%s2 + $0x1f0] sm:$0xff]
    %v200 = vld [vmem:[%s2 + $0x1f8] sm:$0xff]
    %v201 = vld [vmem:[%s3] sm:$0xff]
    %v202 = vld [vmem:[%s3 + $0x8] sm:$0xff]
    %v203 = vld [vmem:[%s3 + $0x10] sm:$0xff]
    %v204 = vld [vmem:[%s3 + $0x18] sm:$0xff]
    %v205 = vld [vmem:[%s3 + $0x20] sm:$0xff]
    %v206 = vld [vmem:[%s3 + $0x28] sm:$0xff]
    %v207 = vld [vmem:[%s3 + $0x30] sm:$0xff]
    %v208 = vld [vmem:[%s3 + $0x38] sm:$0xff]
    %v209 = vld [vmem:[%s3 + $0x40] sm:$0xff]
    %v210 = vld [vmem:[%s3 + $0x48] sm:$0xff]
    %v211 = vld [vmem:[%s3 + $0x50] sm:$0xff]
    %v212 = vld [vmem:[%s3 + $0x58] sm:$0xff]
    %v213 = vld [vmem:[%s3 + $0x60] sm:$0xff]
    %v214 = vld [vmem:[%s3 + $0x68] sm:$0xff]
    %v215 = vld [vmem:[%s3 + $0x70] sm:$0xff]
    %v216 = vld [vmem:[%s3 + $0x78] sm:$0xff]
    %v217 = vld [vmem:[%s3 + $0x80] sm:$0xff]
    %v218 = vld [vmem:[%s3 + $0x88] sm:$0xff]
    %v219 = vld [vmem:[%s3 + $0x90] sm:$0xff]
    %v220 = vld [vmem:[%s3 + $0x98] sm:$0xff]
    %v221 = vld [vmem:[%s3 + $0xa0] sm:$0xff]
    %v222 = vld [vmem:[%s3 + $0xa8] sm:$0xff]
    %v223 = vld [vmem:[%s3 + $0xb0] sm:$0xff]
    %v224 = vld [vmem:[%s3 + $0xb8] sm:$0xff]
    %v225 = vld [vmem:[%s3 + $0xc0] sm:$0xff]
    %v226 = vld [vmem:[%s3 + $0xc8] sm:$0xff]
    %v227 = vld [vmem:[%s3 + $0xd0] sm:$0xff]
    %v228 = vld [vmem:[%s3 + $0xd8] sm:$0xff]
    %v229 = vld [vmem:[%s3 + $0xe0] sm:$0xff]
    %v230 = vld [vmem:[%s3 + $0xe8] sm:$0xff]
    %v231 = vld [vmem:[%s3 + $0xf0] sm:$0xff]
    %v232 = vld [vmem:[%s3 + $0xf8] sm:$0xff]
    %v233 = vld [vmem:[%s3 + $0x100] sm:$0xff]
    %v234 = vld [vmem:[%s3 + $0x108] sm:$0xff]
    %v235 = vld [vmem:[%s3 + $0x110] sm:$0xff]
    %v236 = vld [vmem:[%s3 + $0x118] sm:$0xff]
    %v237 = vld [vmem:[%s3 + $0x120] sm:$0xff]
    %v238 = vld [vmem:[%s3 + $0x128] sm:$0xff]
    %v239 = vld [vmem:[%s3 + $0x130] sm:$0xff]
    %v240 = vld [vmem:[%s3 + $0x138] sm:$0xff]
    %v241 = vld [vmem:[%s3 + $0x140] sm:$0xff]
    %v242 = vld [vmem:[%s3 + $0x148] sm:$0xff]
    %v243 = vld [vmem:[%s3 + $0x150] sm:$0xff]
    %v244 = vld [vmem:[%s3 + $0x158] sm:$0xff]
    %v245 = vld [vmem:[%s3 + $0x160] sm:$0xff]
    %v246 = vld [vmem:[%s3 + $0x168] sm:$0xff]
    %v247 = vld [vmem:[%s3 + $0x170] sm:$0xff]
    %v248 = vld [vmem:[%s3 + $0x178] sm:$0xff]
    %v249 = vld [vmem:[%s3 + $0x180] sm:$0xff]
    %v250 = vld [vmem:[%s3 + $0x188] sm:$0xff]
    %v251 = vld [vmem:[%s3 + $0x190] sm:$0xff]
    %v252 = vld [vmem:[%s3 + $0x198] sm:$0xff]
    %v253 = vld [vmem:[%s3 + $0x1a0] sm:$0xff]
    %v254 = vld [vmem:[%s3 + $0x1a8] sm:$0xff]
    %v255 = vld [vmem:[%s3 + $0x1b0] sm:$0xff]
    %v256 = vld [vmem:[%s3 + $0x1b8] sm:$0xff]
    %v257 = vld [vmem:[%s3 + $0x1c0] sm:$0xff]
    %v258 = vld [vmem:[%s3 + $0x1c8] sm:$0xff]
    %v259 = vld [vmem:[%s3 + $0x1d0] sm:$0xff]
    %v260 = vld [vmem:[%s3 + $0x1d8] sm:$0xff]
    %v261 = vld [vmem:[%s3 + $0x1e0] sm:$0xff]
    %v262 = vld [vmem:[%s3 + $0x1e8] sm:$0xff]
    %v263 = vld [vmem:[%s3 + $0x1f0] sm:$0xff]
    %v264 = vld [vmem:[%s3 + $0x1f8] sm:$0xff]
    %v265 = vld [vmem:[#allocation2] sm:$0xff]
    %v266 = vld [vmem:[#allocation2 + $0x8] sm:$0xff]
    %v267 = vld [vmem:[#allocation2 + $0x10] sm:$0xff]
    %v268 = vld [vmem:[#allocation2 + $0x18] sm:$0xff]
    %v269 = vld [vmem:[#allocation2 + $0x20] sm:$0xff]
    %v270 = vld [vmem:[#allocation2 + $0x28] sm:$0xff]
    %v271 = vld [vmem:[#allocation2 + $0x30] sm:$0xff]
    %v272 = vld [vmem:[#allocation2 + $0x38] sm:$0xff]
    %v273 = vld [vmem:[#allocation2 + $0x40] sm:$0xff]
    %v274 = vld [vmem:[#allocation2 + $0x48] sm:$0xff]
    %v275 = vld [vmem:[#allocation2 + $0x50] sm:$0xff]
    %v276 = vld [vmem:[#allocation2 + $0x58] sm:$0xff]
    %v277 = vld [vmem:[#allocation2 + $0x60] sm:$0xff]
    %v278 = vld [vmem:[#allocation2 + $0x68] sm:$0xff]
    %v279 = vld [vmem:[#allocation2 + $0x70] sm:$0xff]
    %v280 = vld [vmem:[#allocation2 + $0x78] sm:$0xff]
    %v281 = vld [vmem:[#allocation2 + $0x80] sm:$0xff]
    %v282 = vld [vmem:[#allocation2 + $0x88] sm:$0xff]
    %v283 = vld [vmem:[#allocation2 + $0x90] sm:$0xff]
    %v284 = vld [vmem:[#allocation2 + $0x98] sm:$0xff]
    %v285 = vld [vmem:[#allocation2 + $0xa0] sm:$0xff]
    %v286 = vld [vmem:[#allocation2 + $0xa8] sm:$0xff]
    %v287 = vld [vmem:[#allocation2 + $0xb0] sm:$0xff]
    %v288 = vld [vmem:[#allocation2 + $0xb8] sm:$0xff]
    %v289 = vld [vmem:[#allocation2 + $0xc0] sm:$0xff]
    %v290 = vld [vmem:[#allocation2 + $0xc8] sm:$0xff]
    %v291 = vld [vmem:[#allocation2 + $0xd0] sm:$0xff]
    %v292 = vld [vmem:[#allocation2 + $0xd8] sm:$0xff]
    %v293 = vld [vmem:[#allocation2 + $0xe0] sm:$0xff]
    %v294 = vld [vmem:[#allocation2 + $0xe8] sm:$0xff]
    %v295 = vld [vmem:[#allocation2 + $0xf0] sm:$0xff]
    %v296 = vld [vmem:[#allocation2 + $0xf8] sm:$0xff]
    %v297 = vld [vmem:[#allocation2 + $0x100] sm:$0xff]
    %v298 = vld [vmem:[#allocation2 + $0x108] sm:$0xff]
    %v299 = vld [vmem:[#allocation2 + $0x110] sm:$0xff]
    %v300 = vld [vmem:[#allocation2 + $0x118] sm:$0xff]
    %v301 = vld [vmem:[#allocation2 + $0x120] sm:$0xff]
    %v302 = vld [vmem:[#allocation2 + $0x128] sm:$0xff]
    %v303 = vld [vmem:[#allocation2 + $0x130] sm:$0xff]
    %v304 = vld [vmem:[#allocation2 + $0x138] sm:$0xff]
    %v305 = vld [vmem:[#allocation2 + $0x140] sm:$0xff]
    %v306 = vld [vmem:[#allocation2 + $0x148] sm:$0xff]
    %v307 = vld [vmem:[#allocation2 + $0x150] sm:$0xff]
    %v308 = vld [vmem:[#allocation2 + $0x158] sm:$0xff]
    %v309 = vld [vmem:[#allocation2 + $0x160] sm:$0xff]
    %v310 = vld [vmem:[#allocation2 + $0x168] sm:$0xff]
    %v311 = vld [vmem:[#allocation2 + $0x170] sm:$0xff]
    %v312 = vld [vmem:[#allocation2 + $0x178] sm:$0xff]
    %v313 = vld [vmem:[#allocation2 + $0x180] sm:$0xff]
    %v314 = vld [vmem:[#allocation2 + $0x188] sm:$0xff]
    %v315 = vld [vmem:[#allocation2 + $0x190] sm:$0xff]
    %v316 = vld [vmem:[#allocation2 + $0x198] sm:$0xff]
    %v317 = vld [vmem:[#allocation2 + $0x1a0] sm:$0xff]
    %v318 = vld [vmem:[#allocation2 + $0x1a8] sm:$0xff]
    %v319 = vld [vmem:[#allocation2 + $0x1b0] sm:$0xff]
    %v320 = vld [vmem:[#allocation2 + $0x1b8] sm:$0xff]
    %v321 = vld [vmem:[#allocation2 + $0x1c0] sm:$0xff]
    %v322 = vld [vmem:[#allocation2 + $0x1c8] sm:$0xff]
    %v323 = vld [vmem:[#allocation2 + $0x1d0] sm:$0xff]
    %v324 = vld [vmem:[#allocation2 + $0x1d8] sm:$0xff]
    %v325 = vld [vmem:[#allocation2 + $0x1e0] sm:$0xff]
    %v326 = vld [vmem:[#allocation2 + $0x1e8] sm:$0xff]
    %v327 = vld [vmem:[#allocation2 + $0x1f0] sm:$0xff]
    %v328 = vld [vmem:[#allocation2 + $0x1f8] sm:$0xff]
    %v329 = vlaneseq
    %v330 = vshrl.u32 %v329, 7
    %v331 = vsub.s32 0, %v330
    %v332 = vrot.slane %v60, %v331
    %v333 = vlaneseq
    %v334 = vshrl.u32 %v333, 7
    %v335 = vsub.s32 0, %v334
    %v336 = vrot.slane %v74, %v335
    %v337 = vlaneseq
    %v338 = vshrl.u32 %v337, 7
    %v339 = vsub.s32 0, %v338
    %v340 = vrot.slane %v82, %v339
    %v341 = vlaneseq
    %v342 = vshrl.u32 %v341, 7
    %v343 = vsub.s32 0, %v342
    %v344 = vrot.slane %v84, %v343
    %v345 = vlaneseq
    %v346 = vshrl.u32 %v345, 7
    %v347 = vsub.s32 0, %v346
    %v348 = vrot.slane %v67, %v347
    %v349 = vlaneseq
    %v350 = vshrl.u32 %v349, 7
    %v351 = vsub.s32 0, %v350
    %v352 = vrot.slane %v81, %v351
    %v353 = vlaneseq
    %v354 = vshrl.u32 %v353, 7
    %v355 = vsub.s32 0, %v354
    %v356 = vrot.slane %v83, %v355
    %v357 = vlaneseq
    %v358 = vshrl.u32 %v357, 7
    %v359 = vsub.s32 0, %v358
    %v360 = vrot.slane %v85, %v359
    %v369 = vmul.f32 %v137, %v332
    %v370 = vmul.f32 %v138, %v332
    %v371 = vmul.f32 %v139, %v332
    %v372 = vmul.f32 %v140, %v332
    %v373 = vmul.f32 %v141, %v332
    %v374 = vmul.f32 %v142, %v332
    %v375 = vmul.f32 %v143, %v332
    %v376 = vmul.f32 %v144, %v332
    %v377 = vmul.f32 %v145, %v332
    %v378 = vmul.f32 %v146, %v332
    %v379 = vmul.f32 %v147, %v332
    %v380 = vmul.f32 %v148, %v332
    %v381 = vmul.f32 %v149, %v332
    %v382 = vmul.f32 %v150, %v332
    %v383 = vmul.f32 %v151, %v332
    %v384 = vmul.f32 %v152, %v332
    %v385 = vmul.f32 %v153, %v332
    %v386 = vmul.f32 %v154, %v332
    %v387 = vmul.f32 %v155, %v332
    %v388 = vmul.f32 %v156, %v332
    %v389 = vmul.f32 %v157, %v332
    %v390 = vmul.f32 %v158, %v332
    %v391 = vmul.f32 %v159, %v332
    %v392 = vmul.f32 %v160, %v332
    %v393 = vmul.f32 %v161, %v332
    %v394 = vmul.f32 %v162, %v332
    %v395 = vmul.f32 %v163, %v332
    %v396 = vmul.f32 %v164, %v332
    %v397 = vmul.f32 %v165, %v332
    %v398 = vmul.f32 %v166, %v332
    %v399 = vmul.f32 %v167, %v332
    %v400 = vmul.f32 %v168, %v332
    %v401 = vmul.f32 %v169, %v332
    %v402 = vmul.f32 %v170, %v332
    %v403 = vmul.f32 %v171, %v332
    %v404 = vmul.f32 %v172, %v332
    %v405 = vmul.f32 %v173, %v332
    %v406 = vmul.f32 %v174, %v332
    %v407 = vmul.f32 %v175, %v332
    %v408 = vmul.f32 %v176, %v332
    %v409 = vmul.f32 %v177, %v332
    %v410 = vmul.f32 %v178, %v332
    %v411 = vmul.f32 %v179, %v332
    %v412 = vmul.f32 %v180, %v332
    %v413 = vmul.f32 %v181, %v332
    %v414 = vmul.f32 %v182, %v332
    %v415 = vmul.f32 %v183, %v332
    %v416 = vmul.f32 %v184, %v332
    %v417 = vmul.f32 %v185, %v332
    %v418 = vmul.f32 %v186, %v332
    %v419 = vmul.f32 %v187, %v332
    %v420 = vmul.f32 %v188, %v332
    %v421 = vmul.f32 %v189, %v332
    %v422 = vmul.f32 %v190, %v332
    %v423 = vmul.f32 %v191, %v332
    %v424 = vmul.f32 %v192, %v332
    %v425 = vmul.f32 %v193, %v332
    %v426 = vmul.f32 %v194, %v332
    %v427 = vmul.f32 %v195, %v332
    %v428 = vmul.f32 %v196, %v332
    %v429 = vmul.f32 %v197, %v332
    %v430 = vmul.f32 %v198, %v332
    %v431 = vmul.f32 %v199, %v332
    %v432 = vmul.f32 %v200, %v332
    %v433 = vmul.f32 %v137, %v336
    %v434 = vmul.f32 %v138, %v336
    %v435 = vmul.f32 %v139, %v336
    %v436 = vmul.f32 %v140, %v336
    %v437 = vmul.f32 %v141, %v336
    %v438 = vmul.f32 %v142, %v336
    %v439 = vmul.f32 %v143, %v336
    %v440 = vmul.f32 %v144, %v336
    %v441 = vmul.f32 %v145, %v336
    %v442 = vmul.f32 %v146, %v336
    %v443 = vmul.f32 %v147, %v336
    %v444 = vmul.f32 %v148, %v336
    %v445 = vmul.f32 %v149, %v336
    %v446 = vmul.f32 %v150, %v336
    %v447 = vmul.f32 %v151, %v336
    %v448 = vmul.f32 %v152, %v336
    %v449 = vmul.f32 %v153, %v336
    %v450 = vmul.f32 %v154, %v336
    %v451 = vmul.f32 %v155, %v336
    %v452 = vmul.f32 %v156, %v336
    %v453 = vmul.f32 %v157, %v336
    %v454 = vmul.f32 %v158, %v336
    %v455 = vmul.f32 %v159, %v336
    %v456 = vmul.f32 %v160, %v336
    %v457 = vmul.f32 %v161, %v336
    %v458 = vmul.f32 %v162, %v336
    %v459 = vmul.f32 %v163, %v336
    %v460 = vmul.f32 %v164, %v336
    %v461 = vmul.f32 %v165, %v336
    %v462 = vmul.f32 %v166, %v336
    %v463 = vmul.f32 %v167, %v336
    %v464 = vmul.f32 %v168, %v336
    %v465 = vmul.f32 %v169, %v336
    %v466 = vmul.f32 %v170, %v336
    %v467 = vmul.f32 %v171, %v336
    %v468 = vmul.f32 %v172, %v336
    %v469 = vmul.f32 %v173, %v336
    %v470 = vmul.f32 %v174, %v336
    %v471 = vmul.f32 %v175, %v336
    %v472 = vmul.f32 %v176, %v336
    %v473 = vmul.f32 %v177, %v336
    %v474 = vmul.f32 %v178, %v336
    %v475 = vmul.f32 %v179, %v336
    %v476 = vmul.f32 %v180, %v336
    %v477 = vmul.f32 %v181, %v336
    %v478 = vmul.f32 %v182, %v336
    %v479 = vmul.f32 %v183, %v336
    %v480 = vmul.f32 %v184, %v336
    %v481 = vmul.f32 %v185, %v336
    %v482 = vmul.f32 %v186, %v336
    %v483 = vmul.f32 %v187, %v336
    %v484 = vmul.f32 %v188, %v336
    %v485 = vmul.f32 %v189, %v336
    %v486 = vmul.f32 %v190, %v336
    %v487 = vmul.f32 %v191, %v336
    %v488 = vmul.f32 %v192, %v336
    %v489 = vmul.f32 %v193, %v336
    %v490 = vmul.f32 %v194, %v336
    %v491 = vmul.f32 %v195, %v336
    %v492 = vmul.f32 %v196, %v336
    %v493 = vmul.f32 %v197, %v336
    %v494 = vmul.f32 %v198, %v336
    %v495 = vmul.f32 %v199, %v336
    %v496 = vmul.f32 %v200, %v336
    %v497 = vmul.f32 %v137, %v340
    %v498 = vmul.f32 %v138, %v340
    %v499 = vmul.f32 %v139, %v340
    %v500 = vmul.f32 %v140, %v340
    %v501 = vmul.f32 %v141, %v340
    %v502 = vmul.f32 %v142, %v340
    %v503 = vmul.f32 %v143, %v340
    %v504 = vmul.f32 %v144, %v340
    %v505 = vmul.f32 %v145, %v340
    %v506 = vmul.f32 %v146, %v340
    %v507 = vmul.f32 %v147, %v340
    %v508 = vmul.f32 %v148, %v340
    %v509 = vmul.f32 %v149, %v340
    %v510 = vmul.f32 %v150, %v340
    %v511 = vmul.f32 %v151, %v340
    %v512 = vmul.f32 %v152, %v340
    %v513 = vmul.f32 %v153, %v340
    %v514 = vmul.f32 %v154, %v340
    %v515 = vmul.f32 %v155, %v340
    %v516 = vmul.f32 %v156, %v340
    %v517 = vmul.f32 %v157, %v340
    %v518 = vmul.f32 %v158, %v340
    %v519 = vmul.f32 %v159, %v340
    %v520 = vmul.f32 %v160, %v340
    %v521 = vmul.f32 %v161, %v340
    %v522 = vmul.f32 %v162, %v340
    %v523 = vmul.f32 %v163, %v340
    %v524 = vmul.f32 %v164, %v340
    %v525 = vmul.f32 %v165, %v340
    %v526 = vmul.f32 %v166, %v340
    %v527 = vmul.f32 %v167, %v340
    %v528 = vmul.f32 %v168, %v340
    %v529 = vmul.f32 %v169, %v340
    %v530 = vmul.f32 %v170, %v340
    %v531 = vmul.f32 %v171, %v340
    %v532 = vmul.f32 %v172, %v340
    %v533 = vmul.f32 %v173, %v340
    %v534 = vmul.f32 %v174, %v340
    %v535 = vmul.f32 %v175, %v340
    %v536 = vmul.f32 %v176, %v340
    %v537 = vmul.f32 %v177, %v340
    %v538 = vmul.f32 %v178, %v340
    %v539 = vmul.f32 %v179, %v340
    %v540 = vmul.f32 %v180, %v340
    %v541 = vmul.f32 %v181, %v340
    %v542 = vmul.f32 %v182, %v340
    %v543 = vmul.f32 %v183, %v340
    %v544 = vmul.f32 %v184, %v340
    %v545 = vmul.f32 %v185, %v340
    %v546 = vmul.f32 %v186, %v340
    %v547 = vmul.f32 %v187, %v340
    %v548 = vmul.f32 %v188, %v340
    %v549 = vmul.f32 %v189, %v340
    %v550 = vmul.f32 %v190, %v340
    %v551 = vmul.f32 %v191, %v340
    %v552 = vmul.f32 %v192, %v340
    %v553 = vmul.f32 %v193, %v340
    %v554 = vmul.f32 %v194, %v340
    %v555 = vmul.f32 %v195, %v340
    %v556 = vmul.f32 %v196, %v340
    %v557 = vmul.f32 %v197, %v340
    %v558 = vmul.f32 %v198, %v340
    %v559 = vmul.f32 %v199, %v340
    %v560 = vmul.f32 %v200, %v340
    %v561 = vmul.f32 %v137, %v344
    %v562 = vmul.f32 %v138, %v344
    %v563 = vmul.f32 %v139, %v344
    %v564 = vmul.f32 %v140, %v344
    %v565 = vmul.f32 %v141, %v344
    %v566 = vmul.f32 %v142, %v344
    %v567 = vmul.f32 %v143, %v344
    %v568 = vmul.f32 %v144, %v344
    %v569 = vmul.f32 %v145, %v344
    %v570 = vmul.f32 %v146, %v344
    %v571 = vmul.f32 %v147, %v344
    %v572 = vmul.f32 %v148, %v344
    %v573 = vmul.f32 %v149, %v344
    %v574 = vmul.f32 %v150, %v344
    %v575 = vmul.f32 %v151, %v344
    %v576 = vmul.f32 %v152, %v344
    %v577 = vmul.f32 %v153, %v344
    %v578 = vmul.f32 %v154, %v344
    %v579 = vmul.f32 %v155, %v344
    %v580 = vmul.f32 %v156, %v344
    %v581 = vmul.f32 %v157, %v344
    %v582 = vmul.f32 %v158, %v344
    %v583 = vmul.f32 %v159, %v344
    %v584 = vmul.f32 %v160, %v344
    %v585 = vmul.f32 %v161, %v344
    %v586 = vmul.f32 %v162, %v344
    %v587 = vmul.f32 %v163, %v344
    %v588 = vmul.f32 %v164, %v344
    %v589 = vmul.f32 %v165, %v344
    %v590 = vmul.f32 %v166, %v344
    %v591 = vmul.f32 %v167, %v344
    %v592 = vmul.f32 %v168, %v344
    %v593 = vmul.f32 %v169, %v344
    %v594 = vmul.f32 %v170, %v344
    %v595 = vmul.f32 %v171, %v344
    %v596 = vmul.f32 %v172, %v344
    %v597 = vmul.f32 %v173, %v344
    %v598 = vmul.f32 %v174, %v344
    %v599 = vmul.f32 %v175, %v344
    %v600 = vmul.f32 %v176, %v344
    %v601 = vmul.f32 %v177, %v344
    %v602 = vmul.f32 %v178, %v344
    %v603 = vmul.f32 %v179, %v344
    %v604 = vmul.f32 %v180, %v344
    %v605 = vmul.f32 %v181, %v344
    %v606 = vmul.f32 %v182, %v344
    %v607 = vmul.f32 %v183, %v344
    %v608 = vmul.f32 %v184, %v344
    %v609 = vmul.f32 %v185, %v344
    %v610 = vmul.f32 %v186, %v344
    %v611 = vmul.f32 %v187, %v344
    %v612 = vmul.f32 %v188, %v344
    %v613 = vmul.f32 %v189, %v344
    %v614 = vmul.f32 %v190, %v344
    %v615 = vmul.f32 %v191, %v344
    %v616 = vmul.f32 %v192, %v344
    %v617 = vmul.f32 %v193, %v344
    %v618 = vmul.f32 %v194, %v344
    %v619 = vmul.f32 %v195, %v344
    %v620 = vmul.f32 %v196, %v344
    %v621 = vmul.f32 %v197, %v344
    %v622 = vmul.f32 %v198, %v344
    %v623 = vmul.f32 %v199, %v344
    %v624 = vmul.f32 %v200, %v344
    %v625 = vmul.f32 %v137, %v348
    %v626 = vmul.f32 %v138, %v348
    %v627 = vmul.f32 %v139, %v348
    %v628 = vmul.f32 %v140, %v348
    %v629 = vmul.f32 %v141, %v348
    %v630 = vmul.f32 %v142, %v348
    %v631 = vmul.f32 %v143, %v348
    %v632 = vmul.f32 %v144, %v348
    %v633 = vmul.f32 %v145, %v348
    %v634 = vmul.f32 %v146, %v348
    %v635 = vmul.f32 %v147, %v348
    %v636 = vmul.f32 %v148, %v348
    %v637 = vmul.f32 %v149, %v348
    %v638 = vmul.f32 %v150, %v348
    %v639 = vmul.f32 %v151, %v348
    %v640 = vmul.f32 %v152, %v348
    %v641 = vmul.f32 %v153, %v348
    %v642 = vmul.f32 %v154, %v348
    %v643 = vmul.f32 %v155, %v348
    %v644 = vmul.f32 %v156, %v348
    %v645 = vmul.f32 %v157, %v348
    %v646 = vmul.f32 %v158, %v348
    %v647 = vmul.f32 %v159, %v348
    %v648 = vmul.f32 %v160, %v348
    %v649 = vmul.f32 %v161, %v348
    %v650 = vmul.f32 %v162, %v348
    %v651 = vmul.f32 %v163, %v348
    %v652 = vmul.f32 %v164, %v348
    %v653 = vmul.f32 %v165, %v348
    %v654 = vmul.f32 %v166, %v348
    %v655 = vmul.f32 %v167, %v348
    %v656 = vmul.f32 %v168, %v348
    %v657 = vmul.f32 %v169, %v348
    %v658 = vmul.f32 %v170, %v348
    %v659 = vmul.f32 %v171, %v348
    %v660 = vmul.f32 %v172, %v348
    %v661 = vmul.f32 %v173, %v348
    %v662 = vmul.f32 %v174, %v348
    %v663 = vmul.f32 %v175, %v348
    %v664 = vmul.f32 %v176, %v348
    %v665 = vmul.f32 %v177, %v348
    %v666 = vmul.f32 %v178, %v348
    %v667 = vmul.f32 %v179, %v348
    %v668 = vmul.f32 %v180, %v348
    %v669 = vmul.f32 %v181, %v348
    %v670 = vmul.f32 %v182, %v348
    %v671 = vmul.f32 %v183, %v348
    %v672 = vmul.f32 %v184, %v348
    %v673 = vmul.f32 %v185, %v348
    %v674 = vmul.f32 %v186, %v348
    %v675 = vmul.f32 %v187, %v348
    %v676 = vmul.f32 %v188, %v348
    %v677 = vmul.f32 %v189, %v348
    %v678 = vmul.f32 %v190, %v348
    %v679 = vmul.f32 %v191, %v348
    %v680 = vmul.f32 %v192, %v348
    %v681 = vmul.f32 %v193, %v348
    %v682 = vmul.f32 %v194, %v348
    %v683 = vmul.f32 %v195, %v348
    %v684 = vmul.f32 %v196, %v348
    %v685 = vmul.f32 %v197, %v348
    %v686 = vmul.f32 %v198, %v348
    %v687 = vmul.f32 %v199, %v348
    %v688 = vmul.f32 %v200, %v348
    %v689 = vmul.f32 %v137, %v352
    %v690 = vmul.f32 %v138, %v352
    %v691 = vmul.f32 %v139, %v352
    %v692 = vmul.f32 %v140, %v352
    %v693 = vmul.f32 %v141, %v352
    %v694 = vmul.f32 %v142, %v352
    %v695 = vmul.f32 %v143, %v352
    %v696 = vmul.f32 %v144, %v352
    %v697 = vmul.f32 %v145, %v352
    %v698 = vmul.f32 %v146, %v352
    %v699 = vmul.f32 %v147, %v352
    %v700 = vmul.f32 %v148, %v352
    %v701 = vmul.f32 %v149, %v352
    %v702 = vmul.f32 %v150, %v352
    %v703 = vmul.f32 %v151, %v352
    %v704 = vmul.f32 %v152, %v352
    %v705 = vmul.f32 %v153, %v352
    %v706 = vmul.f32 %v154, %v352
    %v707 = vmul.f32 %v155, %v352
    %v708 = vmul.f32 %v156, %v352
    %v709 = vmul.f32 %v157, %v352
    %v710 = vmul.f32 %v158, %v352
    %v711 = vmul.f32 %v159, %v352
    %v712 = vmul.f32 %v160, %v352
    %v713 = vmul.f32 %v161, %v352
    %v714 = vmul.f32 %v162, %v352
    %v715 = vmul.f32 %v163, %v352
    %v716 = vmul.f32 %v164, %v352
    %v717 = vmul.f32 %v165, %v352
    %v718 = vmul.f32 %v166, %v352
    %v719 = vmul.f32 %v167, %v352
    %v720 = vmul.f32 %v168, %v352
    %v721 = vmul.f32 %v169, %v352
    %v722 = vmul.f32 %v170, %v352
    %v723 = vmul.f32 %v171, %v352
    %v724 = vmul.f32 %v172, %v352
    %v725 = vmul.f32 %v173, %v352
    %v726 = vmul.f32 %v174, %v352
    %v727 = vmul.f32 %v175, %v352
    %v728 = vmul.f32 %v176, %v352
    %v729 = vmul.f32 %v177, %v352
    %v730 = vmul.f32 %v178, %v352
    %v731 = vmul.f32 %v179, %v352
    %v732 = vmul.f32 %v180, %v352
    %v733 = vmul.f32 %v181, %v352
    %v734 = vmul.f32 %v182, %v352
    %v735 = vmul.f32 %v183, %v352
    %v736 = vmul.f32 %v184, %v352
    %v737 = vmul.f32 %v185, %v352
    %v738 = vmul.f32 %v186, %v352
    %v739 = vmul.f32 %v187, %v352
    %v740 = vmul.f32 %v188, %v352
    %v741 = vmul.f32 %v189, %v352
    %v742 = vmul.f32 %v190, %v352
    %v743 = vmul.f32 %v191, %v352
    %v744 = vmul.f32 %v192, %v352
    %v745 = vmul.f32 %v193, %v352
    %v746 = vmul.f32 %v194, %v352
    %v747 = vmul.f32 %v195, %v352
    %v748 = vmul.f32 %v196, %v352
    %v749 = vmul.f32 %v197, %v352
    %v750 = vmul.f32 %v198, %v352
    %v751 = vmul.f32 %v199, %v352
    %v752 = vmul.f32 %v200, %v352
    %v753 = vmul.f32 %v137, %v356
    %v754 = vmul.f32 %v138, %v356
    %v755 = vmul.f32 %v139, %v356
    %v756 = vmul.f32 %v140, %v356
    %v757 = vmul.f32 %v141, %v356
    %v758 = vmul.f32 %v142, %v356
    %v759 = vmul.f32 %v143, %v356
    %v760 = vmul.f32 %v144, %v356
    %v761 = vmul.f32 %v145, %v356
    %v762 = vmul.f32 %v146, %v356
    %v763 = vmul.f32 %v147, %v356
    %v764 = vmul.f32 %v148, %v356
    %v765 = vmul.f32 %v149, %v356
    %v766 = vmul.f32 %v150, %v356
    %v767 = vmul.f32 %v151, %v356
    %v768 = vmul.f32 %v152, %v356
    %v769 = vmul.f32 %v153, %v356
    %v770 = vmul.f32 %v154, %v356
    %v771 = vmul.f32 %v155, %v356
    %v772 = vmul.f32 %v156, %v356
    %v773 = vmul.f32 %v157, %v356
    %v774 = vmul.f32 %v158, %v356
    %v775 = vmul.f32 %v159, %v356
    %v776 = vmul.f32 %v160, %v356
    %v777 = vmul.f32 %v161, %v356
    %v778 = vmul.f32 %v162, %v356
    %v779 = vmul.f32 %v163, %v356
    %v780 = vmul.f32 %v164, %v356
    %v781 = vmul.f32 %v165, %v356
    %v782 = vmul.f32 %v166, %v356
    %v783 = vmul.f32 %v167, %v356
    %v784 = vmul.f32 %v168, %v356
    %v785 = vmul.f32 %v169, %v356
    %v786 = vmul.f32 %v170, %v356
    %v787 = vmul.f32 %v171, %v356
    %v788 = vmul.f32 %v172, %v356
    %v789 = vmul.f32 %v173, %v356
    %v790 = vmul.f32 %v174, %v356
    %v791 = vmul.f32 %v175, %v356
    %v792 = vmul.f32 %v176, %v356
    %v793 = vmul.f32 %v177, %v356
    %v794 = vmul.f32 %v178, %v356
    %v795 = vmul.f32 %v179, %v356
    %v796 = vmul.f32 %v180, %v356
    %v797 = vmul.f32 %v181, %v356
    %v798 = vmul.f32 %v182, %v356
    %v799 = vmul.f32 %v183, %v356
    %v800 = vmul.f32 %v184, %v356
    %v801 = vmul.f32 %v185, %v356
    %v802 = vmul.f32 %v186, %v356
    %v803 = vmul.f32 %v187, %v356
    %v804 = vmul.f32 %v188, %v356
    %v805 = vmul.f32 %v189, %v356
    %v806 = vmul.f32 %v190, %v356
    %v807 = vmul.f32 %v191, %v356
    %v808 = vmul.f32 %v192, %v356
    %v809 = vmul.f32 %v193, %v356
    %v810 = vmul.f32 %v194, %v356
    %v811 = vmul.f32 %v195, %v356
    %v812 = vmul.f32 %v196, %v356
    %v813 = vmul.f32 %v197, %v356
    %v814 = vmul.f32 %v198, %v356
    %v815 = vmul.f32 %v199, %v356
    %v816 = vmul.f32 %v200, %v356
    %v817 = vmul.f32 %v137, %v360
    %v818 = vmul.f32 %v138, %v360
    %v819 = vmul.f32 %v139, %v360
    %v820 = vmul.f32 %v140, %v360
    %v821 = vmul.f32 %v141, %v360
    %v822 = vmul.f32 %v142, %v360
    %v823 = vmul.f32 %v143, %v360
    %v824 = vmul.f32 %v144, %v360
    %v825 = vmul.f32 %v145, %v360
    %v826 = vmul.f32 %v146, %v360
    %v827 = vmul.f32 %v147, %v360
    %v828 = vmul.f32 %v148, %v360
    %v829 = vmul.f32 %v149, %v360
    %v830 = vmul.f32 %v150, %v360
    %v831 = vmul.f32 %v151, %v360
    %v832 = vmul.f32 %v152, %v360
    %v833 = vmul.f32 %v153, %v360
    %v834 = vmul.f32 %v154, %v360
    %v835 = vmul.f32 %v155, %v360
    %v836 = vmul.f32 %v156, %v360
    %v837 = vmul.f32 %v157, %v360
    %v838 = vmul.f32 %v158, %v360
    %v839 = vmul.f32 %v159, %v360
    %v840 = vmul.f32 %v160, %v360
    %v841 = vmul.f32 %v161, %v360
    %v842 = vmul.f32 %v162, %v360
    %v843 = vmul.f32 %v163, %v360
    %v844 = vmul.f32 %v164, %v360
    %v845 = vmul.f32 %v165, %v360
    %v846 = vmul.f32 %v166, %v360
    %v847 = vmul.f32 %v167, %v360
    %v848 = vmul.f32 %v168, %v360
    %v849 = vmul.f32 %v169, %v360
    %v850 = vmul.f32 %v170, %v360
    %v851 = vmul.f32 %v171, %v360
    %v852 = vmul.f32 %v172, %v360
    %v853 = vmul.f32 %v173, %v360
    %v854 = vmul.f32 %v174, %v360
    %v855 = vmul.f32 %v175, %v360
    %v856 = vmul.f32 %v176, %v360
    %v857 = vmul.f32 %v177, %v360
    %v858 = vmul.f32 %v178, %v360
    %v859 = vmul.f32 %v179, %v360
    %v860 = vmul.f32 %v180, %v360
    %v861 = vmul.f32 %v181, %v360
    %v862 = vmul.f32 %v182, %v360
    %v863 = vmul.f32 %v183, %v360
    %v864 = vmul.f32 %v184, %v360
    %v865 = vmul.f32 %v185, %v360
    %v866 = vmul.f32 %v186, %v360
    %v867 = vmul.f32 %v187, %v360
    %v868 = vmul.f32 %v188, %v360
    %v869 = vmul.f32 %v189, %v360
    %v870 = vmul.f32 %v190, %v360
    %v871 = vmul.f32 %v191, %v360
    %v872 = vmul.f32 %v192, %v360
    %v873 = vmul.f32 %v193, %v360
    %v874 = vmul.f32 %v194, %v360
    %v875 = vmul.f32 %v195, %v360
    %v876 = vmul.f32 %v196, %v360
    %v877 = vmul.f32 %v197, %v360
    %v878 = vmul.f32 %v198, %v360
    %v879 = vmul.f32 %v199, %v360
    %v880 = vmul.f32 %v200, %v360
    %v881 = vlaneseq
    %v882 = vshrl.u32 %v881, 7
    %v883 = vsub.s32 0, %v882
    %v884 = vrot.slane %v111, %v883
    %v885 = vlaneseq
    %v886 = vshrl.u32 %v885, 7
    %v887 = vsub.s32 0, %v886
    %v888 = vrot.slane %v125, %v887
    %v889 = vlaneseq
    %v890 = vshrl.u32 %v889, 7
    %v891 = vsub.s32 0, %v890
    %v892 = vrot.slane %v133, %v891
    %v893 = vlaneseq
    %v894 = vshrl.u32 %v893, 7
    %v895 = vsub.s32 0, %v894
    %v896 = vrot.slane %v135, %v895
    %v897 = vlaneseq
    %v898 = vshrl.u32 %v897, 7
    %v899 = vsub.s32 0, %v898
    %v900 = vrot.slane %v118, %v899
    %v901 = vlaneseq
    %v902 = vshrl.u32 %v901, 7
    %v903 = vsub.s32 0, %v902
    %v904 = vrot.slane %v132, %v903
    %v905 = vlaneseq
    %v906 = vshrl.u32 %v905, 7
    %v907 = vsub.s32 0, %v906
    %v908 = vrot.slane %v134, %v907
    %v909 = vlaneseq
    %v910 = vshrl.u32 %v909, 7
    %v911 = vsub.s32 0, %v910
    %v912 = vrot.slane %v136, %v911
    %v921 = vmul.f32 %v201, %v884
    %v922 = vmul.f32 %v202, %v884
    %v923 = vmul.f32 %v203, %v884
    %v924 = vmul.f32 %v204, %v884
    %v925 = vmul.f32 %v205, %v884
    %v926 = vmul.f32 %v206, %v884
    %v927 = vmul.f32 %v207, %v884
    %v928 = vmul.f32 %v208, %v884
    %v929 = vmul.f32 %v209, %v884
    %v930 = vmul.f32 %v210, %v884
    %v931 = vmul.f32 %v211, %v884
    %v932 = vmul.f32 %v212, %v884
    %v933 = vmul.f32 %v213, %v884
    %v934 = vmul.f32 %v214, %v884
    %v935 = vmul.f32 %v215, %v884
    %v936 = vmul.f32 %v216, %v884
    %v937 = vmul.f32 %v217, %v884
    %v938 = vmul.f32 %v218, %v884
    %v939 = vmul.f32 %v219, %v884
    %v940 = vmul.f32 %v220, %v884
    %v941 = vmul.f32 %v221, %v884
    %v942 = vmul.f32 %v222, %v884
    %v943 = vmul.f32 %v223, %v884
    %v944 = vmul.f32 %v224, %v884
    %v945 = vmul.f32 %v225, %v884
    %v946 = vmul.f32 %v226, %v884
    %v947 = vmul.f32 %v227, %v884
    %v948 = vmul.f32 %v228, %v884
    %v949 = vmul.f32 %v229, %v884
    %v950 = vmul.f32 %v230, %v884
    %v951 = vmul.f32 %v231, %v884
    %v952 = vmul.f32 %v232, %v884
    %v953 = vmul.f32 %v233, %v884
    %v954 = vmul.f32 %v234, %v884
    %v955 = vmul.f32 %v235, %v884
    %v956 = vmul.f32 %v236, %v884
    %v957 = vmul.f32 %v237, %v884
    %v958 = vmul.f32 %v238, %v884
    %v959 = vmul.f32 %v239, %v884
    %v960 = vmul.f32 %v240, %v884
    %v961 = vmul.f32 %v241, %v884
    %v962 = vmul.f32 %v242, %v884
    %v963 = vmul.f32 %v243, %v884
    %v964 = vmul.f32 %v244, %v884
    %v965 = vmul.f32 %v245, %v884
    %v966 = vmul.f32 %v246, %v884
    %v967 = vmul.f32 %v247, %v884
    %v968 = vmul.f32 %v248, %v884
    %v969 = vmul.f32 %v249, %v884
    %v970 = vmul.f32 %v250, %v884
    %v971 = vmul.f32 %v251, %v884
    %v972 = vmul.f32 %v252, %v884
    %v973 = vmul.f32 %v253, %v884
    %v974 = vmul.f32 %v254, %v884
    %v975 = vmul.f32 %v255, %v884
    %v976 = vmul.f32 %v256, %v884
    %v977 = vmul.f32 %v257, %v884
    %v978 = vmul.f32 %v258, %v884
    %v979 = vmul.f32 %v259, %v884
    %v980 = vmul.f32 %v260, %v884
    %v981 = vmul.f32 %v261, %v884
    %v982 = vmul.f32 %v262, %v884
    %v983 = vmul.f32 %v263, %v884
    %v984 = vmul.f32 %v264, %v884
    %v985 = vmul.f32 %v201, %v888
    %v986 = vmul.f32 %v202, %v888
    %v987 = vmul.f32 %v203, %v888
    %v988 = vmul.f32 %v204, %v888
    %v989 = vmul.f32 %v205, %v888
    %v990 = vmul.f32 %v206, %v888
    %v991 = vmul.f32 %v207, %v888
    %v992 = vmul.f32 %v208, %v888
    %v993 = vmul.f32 %v209, %v888
    %v994 = vmul.f32 %v210, %v888
    %v995 = vmul.f32 %v211, %v888
    %v996 = vmul.f32 %v212, %v888
    %v997 = vmul.f32 %v213, %v888
    %v998 = vmul.f32 %v214, %v888
    %v999 = vmul.f32 %v215, %v888
    %v1000 = vmul.f32 %v216, %v888
    %v1001 = vmul.f32 %v217, %v888
    %v1002 = vmul.f32 %v218, %v888
    %v1003 = vmul.f32 %v219, %v888
    %v1004 = vmul.f32 %v220, %v888
    %v1005 = vmul.f32 %v221, %v888
    %v1006 = vmul.f32 %v222, %v888
    %v1007 = vmul.f32 %v223, %v888
    %v1008 = vmul.f32 %v224, %v888
    %v1009 = vmul.f32 %v225, %v888
    %v1010 = vmul.f32 %v226, %v888
    %v1011 = vmul.f32 %v227, %v888
    %v1012 = vmul.f32 %v228, %v888
    %v1013 = vmul.f32 %v229, %v888
    %v1014 = vmul.f32 %v230, %v888
    %v1015 = vmul.f32 %v231, %v888
    %v1016 = vmul.f32 %v232, %v888
    %v1017 = vmul.f32 %v233, %v888
    %v1018 = vmul.f32 %v234, %v888
    %v1019 = vmul.f32 %v235, %v888
    %v1020 = vmul.f32 %v236, %v888
    %v1021 = vmul.f32 %v237, %v888
    %v1022 = vmul.f32 %v238, %v888
    %v1023 = vmul.f32 %v239, %v888
    %v1024 = vmul.f32 %v240, %v888
    %v1025 = vmul.f32 %v241, %v888
    %v1026 = vmul.f32 %v242, %v888
    %v1027 = vmul.f32 %v243, %v888
    %v1028 = vmul.f32 %v244, %v888
    %v1029 = vmul.f32 %v245, %v888
    %v1030 = vmul.f32 %v246, %v888
    %v1031 = vmul.f32 %v247, %v888
    %v1032 = vmul.f32 %v248, %v888
    %v1033 = vmul.f32 %v249, %v888
    %v1034 = vmul.f32 %v250, %v888
    %v1035 = vmul.f32 %v251, %v888
    %v1036 = vmul.f32 %v252, %v888
    %v1037 = vmul.f32 %v253, %v888
    %v1038 = vmul.f32 %v254, %v888
    %v1039 = vmul.f32 %v255, %v888
    %v1040 = vmul.f32 %v256, %v888
    %v1041 = vmul.f32 %v257, %v888
    %v1042 = vmul.f32 %v258, %v888
    %v1043 = vmul.f32 %v259, %v888
    %v1044 = vmul.f32 %v260, %v888
    %v1045 = vmul.f32 %v261, %v888
    %v1046 = vmul.f32 %v262, %v888
    %v1047 = vmul.f32 %v263, %v888
    %v1048 = vmul.f32 %v264, %v888
    %v1049 = vmul.f32 %v201, %v892
    %v1050 = vmul.f32 %v202, %v892
    %v1051 = vmul.f32 %v203, %v892
    %v1052 = vmul.f32 %v204, %v892
    %v1053 = vmul.f32 %v205, %v892
    %v1054 = vmul.f32 %v206, %v892
    %v1055 = vmul.f32 %v207, %v892
    %v1056 = vmul.f32 %v208, %v892
    %v1057 = vmul.f32 %v209, %v892
    %v1058 = vmul.f32 %v210, %v892
    %v1059 = vmul.f32 %v211, %v892
    %v1060 = vmul.f32 %v212, %v892
    %v1061 = vmul.f32 %v213, %v892
    %v1062 = vmul.f32 %v214, %v892
    %v1063 = vmul.f32 %v215, %v892
    %v1064 = vmul.f32 %v216, %v892
    %v1065 = vmul.f32 %v217, %v892
    %v1066 = vmul.f32 %v218, %v892
    %v1067 = vmul.f32 %v219, %v892
    %v1068 = vmul.f32 %v220, %v892
    %v1069 = vmul.f32 %v221, %v892
    %v1070 = vmul.f32 %v222, %v892
    %v1071 = vmul.f32 %v223, %v892
    %v1072 = vmul.f32 %v224, %v892
    %v1073 = vmul.f32 %v225, %v892
    %v1074 = vmul.f32 %v226, %v892
    %v1075 = vmul.f32 %v227, %v892
    %v1076 = vmul.f32 %v228, %v892
    %v1077 = vmul.f32 %v229, %v892
    %v1078 = vmul.f32 %v230, %v892
    %v1079 = vmul.f32 %v231, %v892
    %v1080 = vmul.f32 %v232, %v892
    %v1081 = vmul.f32 %v233, %v892
    %v1082 = vmul.f32 %v234, %v892
    %v1083 = vmul.f32 %v235, %v892
    %v1084 = vmul.f32 %v236, %v892
    %v1085 = vmul.f32 %v237, %v892
    %v1086 = vmul.f32 %v238, %v892
    %v1087 = vmul.f32 %v239, %v892
    %v1088 = vmul.f32 %v240, %v892
    %v1089 = vmul.f32 %v241, %v892
    %v1090 = vmul.f32 %v242, %v892
    %v1091 = vmul.f32 %v243, %v892
    %v1092 = vmul.f32 %v244, %v892
    %v1093 = vmul.f32 %v245, %v892
    %v1094 = vmul.f32 %v246, %v892
    %v1095 = vmul.f32 %v247, %v892
    %v1096 = vmul.f32 %v248, %v892
    %v1097 = vmul.f32 %v249, %v892
    %v1098 = vmul.f32 %v250, %v892
    %v1099 = vmul.f32 %v251, %v892
    %v1100 = vmul.f32 %v252, %v892
    %v1101 = vmul.f32 %v253, %v892
    %v1102 = vmul.f32 %v254, %v892
    %v1103 = vmul.f32 %v255, %v892
    %v1104 = vmul.f32 %v256, %v892
    %v1105 = vmul.f32 %v257, %v892
    %v1106 = vmul.f32 %v258, %v892
    %v1107 = vmul.f32 %v259, %v892
    %v1108 = vmul.f32 %v260, %v892
    %v1109 = vmul.f32 %v261, %v892
    %v1110 = vmul.f32 %v262, %v892
    %v1111 = vmul.f32 %v263, %v892
    %v1112 = vmul.f32 %v264, %v892
    %v1113 = vmul.f32 %v201, %v896
    %v1114 = vmul.f32 %v202, %v896
    %v1115 = vmul.f32 %v203, %v896
    %v1116 = vmul.f32 %v204, %v896
    %v1117 = vmul.f32 %v205, %v896
    %v1118 = vmul.f32 %v206, %v896
    %v1119 = vmul.f32 %v207, %v896
    %v1120 = vmul.f32 %v208, %v896
    %v1121 = vmul.f32 %v209, %v896
    %v1122 = vmul.f32 %v210, %v896
    %v1123 = vmul.f32 %v211, %v896
    %v1124 = vmul.f32 %v212, %v896
    %v1125 = vmul.f32 %v213, %v896
    %v1126 = vmul.f32 %v214, %v896
    %v1127 = vmul.f32 %v215, %v896
    %v1128 = vmul.f32 %v216, %v896
    %v1129 = vmul.f32 %v217, %v896
    %v1130 = vmul.f32 %v218, %v896
    %v1131 = vmul.f32 %v219, %v896
    %v1132 = vmul.f32 %v220, %v896
    %v1133 = vmul.f32 %v221, %v896
    %v1134 = vmul.f32 %v222, %v896
    %v1135 = vmul.f32 %v223, %v896
    %v1136 = vmul.f32 %v224, %v896
    %v1137 = vmul.f32 %v225, %v896
    %v1138 = vmul.f32 %v226, %v896
    %v1139 = vmul.f32 %v227, %v896
    %v1140 = vmul.f32 %v228, %v896
    %v1141 = vmul.f32 %v229, %v896
    %v1142 = vmul.f32 %v230, %v896
    %v1143 = vmul.f32 %v231, %v896
    %v1144 = vmul.f32 %v232, %v896
    %v1145 = vmul.f32 %v233, %v896
    %v1146 = vmul.f32 %v234, %v896
    %v1147 = vmul.f32 %v235, %v896
    %v1148 = vmul.f32 %v236, %v896
    %v1149 = vmul.f32 %v237, %v896
    %v1150 = vmul.f32 %v238, %v896
    %v1151 = vmul.f32 %v239, %v896
    %v1152 = vmul.f32 %v240, %v896
    %v1153 = vmul.f32 %v241, %v896
    %v1154 = vmul.f32 %v242, %v896
    %v1155 = vmul.f32 %v243, %v896
    %v1156 = vmul.f32 %v244, %v896
    %v1157 = vmul.f32 %v245, %v896
    %v1158 = vmul.f32 %v246, %v896
    %v1159 = vmul.f32 %v247, %v896
    %v1160 = vmul.f32 %v248, %v896
    %v1161 = vmul.f32 %v249, %v896
    %v1162 = vmul.f32 %v250, %v896
    %v1163 = vmul.f32 %v251, %v896
    %v1164 = vmul.f32 %v252, %v896
    %v1165 = vmul.f32 %v253, %v896
    %v1166 = vmul.f32 %v254, %v896
    %v1167 = vmul.f32 %v255, %v896
    %v1168 = vmul.f32 %v256, %v896
    %v1169 = vmul.f32 %v257, %v896
    %v1170 = vmul.f32 %v258, %v896
    %v1171 = vmul.f32 %v259, %v896
    %v1172 = vmul.f32 %v260, %v896
    %v1173 = vmul.f32 %v261, %v896
    %v1174 = vmul.f32 %v262, %v896
    %v1175 = vmul.f32 %v263, %v896
    %v1176 = vmul.f32 %v264, %v896
    %v1177 = vmul.f32 %v201, %v900
    %v1178 = vmul.f32 %v202, %v900
    %v1179 = vmul.f32 %v203, %v900
    %v1180 = vmul.f32 %v204, %v900
    %v1181 = vmul.f32 %v205, %v900
    %v1182 = vmul.f32 %v206, %v900
    %v1183 = vmul.f32 %v207, %v900
    %v1184 = vmul.f32 %v208, %v900
    %v1185 = vmul.f32 %v209, %v900
    %v1186 = vmul.f32 %v210, %v900
    %v1187 = vmul.f32 %v211, %v900
    %v1188 = vmul.f32 %v212, %v900
    %v1189 = vmul.f32 %v213, %v900
    %v1190 = vmul.f32 %v214, %v900
    %v1191 = vmul.f32 %v215, %v900
    %v1192 = vmul.f32 %v216, %v900
    %v1193 = vmul.f32 %v217, %v900
    %v1194 = vmul.f32 %v218, %v900
    %v1195 = vmul.f32 %v219, %v900
    %v1196 = vmul.f32 %v220, %v900
    %v1197 = vmul.f32 %v221, %v900
    %v1198 = vmul.f32 %v222, %v900
    %v1199 = vmul.f32 %v223, %v900
    %v1200 = vmul.f32 %v224, %v900
    %v1201 = vmul.f32 %v225, %v900
    %v1202 = vmul.f32 %v226, %v900
    %v1203 = vmul.f32 %v227, %v900
    %v1204 = vmul.f32 %v228, %v900
    %v1205 = vmul.f32 %v229, %v900
    %v1206 = vmul.f32 %v230, %v900
    %v1207 = vmul.f32 %v231, %v900
    %v1208 = vmul.f32 %v232, %v900
    %v1209 = vmul.f32 %v233, %v900
    %v1210 = vmul.f32 %v234, %v900
    %v1211 = vmul.f32 %v235, %v900
    %v1212 = vmul.f32 %v236, %v900
    %v1213 = vmul.f32 %v237, %v900
    %v1214 = vmul.f32 %v238, %v900
    %v1215 = vmul.f32 %v239, %v900
    %v1216 = vmul.f32 %v240, %v900
    %v1217 = vmul.f32 %v241, %v900
    %v1218 = vmul.f32 %v242, %v900
    %v1219 = vmul.f32 %v243, %v900
    %v1220 = vmul.f32 %v244, %v900
    %v1221 = vmul.f32 %v245, %v900
    %v1222 = vmul.f32 %v246, %v900
    %v1223 = vmul.f32 %v247, %v900
    %v1224 = vmul.f32 %v248, %v900
    %v1225 = vmul.f32 %v249, %v900
    %v1226 = vmul.f32 %v250, %v900
    %v1227 = vmul.f32 %v251, %v900
    %v1228 = vmul.f32 %v252, %v900
    %v1229 = vmul.f32 %v253, %v900
    %v1230 = vmul.f32 %v254, %v900
    %v1231 = vmul.f32 %v255, %v900
    %v1232 = vmul.f32 %v256, %v900
    %v1233 = vmul.f32 %v257, %v900
    %v1234 = vmul.f32 %v258, %v900
    %v1235 = vmul.f32 %v259, %v900
    %v1236 = vmul.f32 %v260, %v900
    %v1237 = vmul.f32 %v261, %v900
    %v1238 = vmul.f32 %v262, %v900
    %v1239 = vmul.f32 %v263, %v900
    %v1240 = vmul.f32 %v264, %v900
    %v1241 = vmul.f32 %v201, %v904
    %v1242 = vmul.f32 %v202, %v904
    %v1243 = vmul.f32 %v203, %v904
    %v1244 = vmul.f32 %v204, %v904
    %v1245 = vmul.f32 %v205, %v904
    %v1246 = vmul.f32 %v206, %v904
    %v1247 = vmul.f32 %v207, %v904
    %v1248 = vmul.f32 %v208, %v904
    %v1249 = vmul.f32 %v209, %v904
    %v1250 = vmul.f32 %v210, %v904
    %v1251 = vmul.f32 %v211, %v904
    %v1252 = vmul.f32 %v212, %v904
    %v1253 = vmul.f32 %v213, %v904
    %v1254 = vmul.f32 %v214, %v904
    %v1255 = vmul.f32 %v215, %v904
    %v1256 = vmul.f32 %v216, %v904
    %v1257 = vmul.f32 %v217, %v904
    %v1258 = vmul.f32 %v218, %v904
    %v1259 = vmul.f32 %v219, %v904
    %v1260 = vmul.f32 %v220, %v904
    %v1261 = vmul.f32 %v221, %v904
    %v1262 = vmul.f32 %v222, %v904
    %v1263 = vmul.f32 %v223, %v904
    %v1264 = vmul.f32 %v224, %v904
    %v1265 = vmul.f32 %v225, %v904
    %v1266 = vmul.f32 %v226, %v904
    %v1267 = vmul.f32 %v227, %v904
    %v1268 = vmul.f32 %v228, %v904
    %v1269 = vmul.f32 %v229, %v904
    %v1270 = vmul.f32 %v230, %v904
    %v1271 = vmul.f32 %v231, %v904
    %v1272 = vmul.f32 %v232, %v904
    %v1273 = vmul.f32 %v233, %v904
    %v1274 = vmul.f32 %v234, %v904
    %v1275 = vmul.f32 %v235, %v904
    %v1276 = vmul.f32 %v236, %v904
    %v1277 = vmul.f32 %v237, %v904
    %v1278 = vmul.f32 %v238, %v904
    %v1279 = vmul.f32 %v239, %v904
    %v1280 = vmul.f32 %v240, %v904
    %v1281 = vmul.f32 %v241, %v904
    %v1282 = vmul.f32 %v242, %v904
    %v1283 = vmul.f32 %v243, %v904
    %v1284 = vmul.f32 %v244, %v904
    %v1285 = vmul.f32 %v245, %v904
    %v1286 = vmul.f32 %v246, %v904
    %v1287 = vmul.f32 %v247, %v904
    %v1288 = vmul.f32 %v248, %v904
    %v1289 = vmul.f32 %v249, %v904
    %v1290 = vmul.f32 %v250, %v904
    %v1291 = vmul.f32 %v251, %v904
    %v1292 = vmul.f32 %v252, %v904
    %v1293 = vmul.f32 %v253, %v904
    %v1294 = vmul.f32 %v254, %v904
    %v1295 = vmul.f32 %v255, %v904
    %v1296 = vmul.f32 %v256, %v904
    %v1297 = vmul.f32 %v257, %v904
    %v1298 = vmul.f32 %v258, %v904
    %v1299 = vmul.f32 %v259, %v904
    %v1300 = vmul.f32 %v260, %v904
    %v1301 = vmul.f32 %v261, %v904
    %v1302 = vmul.f32 %v262, %v904
    %v1303 = vmul.f32 %v263, %v904
    %v1304 = vmul.f32 %v264, %v904
    %v1305 = vmul.f32 %v201, %v908
    %v1306 = vmul.f32 %v202, %v908
    %v1307 = vmul.f32 %v203, %v908
    %v1308 = vmul.f32 %v204, %v908
    %v1309 = vmul.f32 %v205, %v908
    %v1310 = vmul.f32 %v206, %v908
    %v1311 = vmul.f32 %v207, %v908
    %v1312 = vmul.f32 %v208, %v908
    %v1313 = vmul.f32 %v209, %v908
    %v1314 = vmul.f32 %v210, %v908
    %v1315 = vmul.f32 %v211, %v908
    %v1316 = vmul.f32 %v212, %v908
    %v1317 = vmul.f32 %v213, %v908
    %v1318 = vmul.f32 %v214, %v908
    %v1319 = vmul.f32 %v215, %v908
    %v1320 = vmul.f32 %v216, %v908
    %v1321 = vmul.f32 %v217, %v908
    %v1322 = vmul.f32 %v218, %v908
    %v1323 = vmul.f32 %v219, %v908
    %v1324 = vmul.f32 %v220, %v908
    %v1325 = vmul.f32 %v221, %v908
    %v1326 = vmul.f32 %v222, %v908
    %v1327 = vmul.f32 %v223, %v908
    %v1328 = vmul.f32 %v224, %v908
    %v1329 = vmul.f32 %v225, %v908
    %v1330 = vmul.f32 %v226, %v908
    %v1331 = vmul.f32 %v227, %v908
    %v1332 = vmul.f32 %v228, %v908
    %v1333 = vmul.f32 %v229, %v908
    %v1334 = vmul.f32 %v230, %v908
    %v1335 = vmul.f32 %v231, %v908
    %v1336 = vmul.f32 %v232, %v908
    %v1337 = vmul.f32 %v233, %v908
    %v1338 = vmul.f32 %v234, %v908
    %v1339 = vmul.f32 %v235, %v908
    %v1340 = vmul.f32 %v236, %v908
    %v1341 = vmul.f32 %v237, %v908
    %v1342 = vmul.f32 %v238, %v908
    %v1343 = vmul.f32 %v239, %v908
    %v1344 = vmul.f32 %v240, %v908
    %v1345 = vmul.f32 %v241, %v908
    %v1346 = vmul.f32 %v242, %v908
    %v1347 = vmul.f32 %v243, %v908
    %v1348 = vmul.f32 %v244, %v908
    %v1349 = vmul.f32 %v245, %v908
    %v1350 = vmul.f32 %v246, %v908
    %v1351 = vmul.f32 %v247, %v908
    %v1352 = vmul.f32 %v248, %v908
    %v1353 = vmul.f32 %v249, %v908
    %v1354 = vmul.f32 %v250, %v908
    %v1355 = vmul.f32 %v251, %v908
    %v1356 = vmul.f32 %v252, %v908
    %v1357 = vmul.f32 %v253, %v908
    %v1358 = vmul.f32 %v254, %v908
    %v1359 = vmul.f32 %v255, %v908
    %v1360 = vmul.f32 %v256, %v908
    %v1361 = vmul.f32 %v257, %v908
    %v1362 = vmul.f32 %v258, %v908
    %v1363 = vmul.f32 %v259, %v908
    %v1364 = vmul.f32 %v260, %v908
    %v1365 = vmul.f32 %v261, %v908
    %v1366 = vmul.f32 %v262, %v908
    %v1367 = vmul.f32 %v263, %v908
    %v1368 = vmul.f32 %v264, %v908
    %v1369 = vmul.f32 %v201, %v912
    %v1370 = vmul.f32 %v202, %v912
    %v1371 = vmul.f32 %v203, %v912
    %v1372 = vmul.f32 %v204, %v912
    %v1373 = vmul.f32 %v205, %v912
    %v1374 = vmul.f32 %v206, %v912
    %v1375 = vmul.f32 %v207, %v912
    %v1376 = vmul.f32 %v208, %v912
    %v1377 = vmul.f32 %v209, %v912
    %v1378 = vmul.f32 %v210, %v912
    %v1379 = vmul.f32 %v211, %v912
    %v1380 = vmul.f32 %v212, %v912
    %v1381 = vmul.f32 %v213, %v912
    %v1382 = vmul.f32 %v214, %v912
    %v1383 = vmul.f32 %v215, %v912
    %v1384 = vmul.f32 %v216, %v912
    %v1385 = vmul.f32 %v217, %v912
    %v1386 = vmul.f32 %v218, %v912
    %v1387 = vmul.f32 %v219, %v912
    %v1388 = vmul.f32 %v220, %v912
    %v1389 = vmul.f32 %v221, %v912
    %v1390 = vmul.f32 %v222, %v912
    %v1391 = vmul.f32 %v223, %v912
    %v1392 = vmul.f32 %v224, %v912
    %v1393 = vmul.f32 %v225, %v912
    %v1394 = vmul.f32 %v226, %v912
    %v1395 = vmul.f32 %v227, %v912
    %v1396 = vmul.f32 %v228, %v912
    %v1397 = vmul.f32 %v229, %v912
    %v1398 = vmul.f32 %v230, %v912
    %v1399 = vmul.f32 %v231, %v912
    %v1400 = vmul.f32 %v232, %v912
    %v1401 = vmul.f32 %v233, %v912
    %v1402 = vmul.f32 %v234, %v912
    %v1403 = vmul.f32 %v235, %v912
    %v1404 = vmul.f32 %v236, %v912
    %v1405 = vmul.f32 %v237, %v912
    %v1406 = vmul.f32 %v238, %v912
    %v1407 = vmul.f32 %v239, %v912
    %v1408 = vmul.f32 %v240, %v912
    %v1409 = vmul.f32 %v241, %v912
    %v1410 = vmul.f32 %v242, %v912
    %v1411 = vmul.f32 %v243, %v912
    %v1412 = vmul.f32 %v244, %v912
    %v1413 = vmul.f32 %v245, %v912
    %v1414 = vmul.f32 %v246, %v912
    %v1415 = vmul.f32 %v247, %v912
    %v1416 = vmul.f32 %v248, %v912
    %v1417 = vmul.f32 %v249, %v912
    %v1418 = vmul.f32 %v250, %v912
    %v1419 = vmul.f32 %v251, %v912
    %v1420 = vmul.f32 %v252, %v912
    %v1421 = vmul.f32 %v253, %v912
    %v1422 = vmul.f32 %v254, %v912
    %v1423 = vmul.f32 %v255, %v912
    %v1424 = vmul.f32 %v256, %v912
    %v1425 = vmul.f32 %v257, %v912
    %v1426 = vmul.f32 %v258, %v912
    %v1427 = vmul.f32 %v259, %v912
    %v1428 = vmul.f32 %v260, %v912
    %v1429 = vmul.f32 %v261, %v912
    %v1430 = vmul.f32 %v262, %v912
    %v1431 = vmul.f32 %v263, %v912
    %v1432 = vmul.f32 %v264, %v912
    %v1433 = vsub.f32 %v369, %v921
    %v1434 = vsub.f32 %v370, %v922
    %v1435 = vsub.f32 %v371, %v923
    %v1436 = vsub.f32 %v372, %v924
    %v1437 = vsub.f32 %v373, %v925
    %v1438 = vsub.f32 %v374, %v926
    %v1439 = vsub.f32 %v375, %v927
    %v1440 = vsub.f32 %v376, %v928
    %v1441 = vsub.f32 %v377, %v929
    %v1442 = vsub.f32 %v378, %v930
    %v1443 = vsub.f32 %v379, %v931
    %v1444 = vsub.f32 %v380, %v932
    %v1445 = vsub.f32 %v381, %v933
    %v1446 = vsub.f32 %v382, %v934
    %v1447 = vsub.f32 %v383, %v935
    %v1448 = vsub.f32 %v384, %v936
    %v1449 = vsub.f32 %v385, %v937
    %v1450 = vsub.f32 %v386, %v938
    %v1451 = vsub.f32 %v387, %v939
    %v1452 = vsub.f32 %v388, %v940
    %v1453 = vsub.f32 %v389, %v941
    %v1454 = vsub.f32 %v390, %v942
    %v1455 = vsub.f32 %v391, %v943
    %v1456 = vsub.f32 %v392, %v944
    %v1457 = vsub.f32 %v393, %v945
    %v1458 = vsub.f32 %v394, %v946
    %v1459 = vsub.f32 %v395, %v947
    %v1460 = vsub.f32 %v396, %v948
    %v1461 = vsub.f32 %v397, %v949
    %v1462 = vsub.f32 %v398, %v950
    %v1463 = vsub.f32 %v399, %v951
    %v1464 = vsub.f32 %v400, %v952
    %v1465 = vsub.f32 %v401, %v953
    %v1466 = vsub.f32 %v402, %v954
    %v1467 = vsub.f32 %v403, %v955
    %v1468 = vsub.f32 %v404, %v956
    %v1469 = vsub.f32 %v405, %v957
    %v1470 = vsub.f32 %v406, %v958
    %v1471 = vsub.f32 %v407, %v959
    %v1472 = vsub.f32 %v408, %v960
    %v1473 = vsub.f32 %v409, %v961
    %v1474 = vsub.f32 %v410, %v962
    %v1475 = vsub.f32 %v411, %v963
    %v1476 = vsub.f32 %v412, %v964
    %v1477 = vsub.f32 %v413, %v965
    %v1478 = vsub.f32 %v414, %v966
    %v1479 = vsub.f32 %v415, %v967
    %v1480 = vsub.f32 %v416, %v968
    %v1481 = vsub.f32 %v417, %v969
    %v1482 = vsub.f32 %v418, %v970
    %v1483 = vsub.f32 %v419, %v971
    %v1484 = vsub.f32 %v420, %v972
    %v1485 = vsub.f32 %v421, %v973
    %v1486 = vsub.f32 %v422, %v974
    %v1487 = vsub.f32 %v423, %v975
    %v1488 = vsub.f32 %v424, %v976
    %v1489 = vsub.f32 %v425, %v977
    %v1490 = vsub.f32 %v426, %v978
    %v1491 = vsub.f32 %v427, %v979
    %v1492 = vsub.f32 %v428, %v980
    %v1493 = vsub.f32 %v429, %v981
    %v1494 = vsub.f32 %v430, %v982
    %v1495 = vsub.f32 %v431, %v983
    %v1496 = vsub.f32 %v432, %v984
    %v1497 = vsub.f32 %v433, %v985
    %v1498 = vsub.f32 %v434, %v986
    %v1499 = vsub.f32 %v435, %v987
    %v1500 = vsub.f32 %v436, %v988
    %v1501 = vsub.f32 %v437, %v989
    %v1502 = vsub.f32 %v438, %v990
    %v1503 = vsub.f32 %v439, %v991
    %v1504 = vsub.f32 %v440, %v992
    %v1505 = vsub.f32 %v441, %v993
    %v1506 = vsub.f32 %v442, %v994
    %v1507 = vsub.f32 %v443, %v995
    %v1508 = vsub.f32 %v444, %v996
    %v1509 = vsub.f32 %v445, %v997
    %v1510 = vsub.f32 %v446, %v998
    %v1511 = vsub.f32 %v447, %v999
    %v1512 = vsub.f32 %v448, %v1000
    %v1513 = vsub.f32 %v449, %v1001
    %v1514 = vsub.f32 %v450, %v1002
    %v1515 = vsub.f32 %v451, %v1003
    %v1516 = vsub.f32 %v452, %v1004
    %v1517 = vsub.f32 %v453, %v1005
    %v1518 = vsub.f32 %v454, %v1006
    %v1519 = vsub.f32 %v455, %v1007
    %v1520 = vsub.f32 %v456, %v1008
    %v1521 = vsub.f32 %v457, %v1009
    %v1522 = vsub.f32 %v458, %v1010
    %v1523 = vsub.f32 %v459, %v1011
    %v1524 = vsub.f32 %v460, %v1012
    %v1525 = vsub.f32 %v461, %v1013
    %v1526 = vsub.f32 %v462, %v1014
    %v1527 = vsub.f32 %v463, %v1015
    %v1528 = vsub.f32 %v464, %v1016
    %v1529 = vsub.f32 %v465, %v1017
    %v1530 = vsub.f32 %v466, %v1018
    %v1531 = vsub.f32 %v467, %v1019
    %v1532 = vsub.f32 %v468, %v1020
    %v1533 = vsub.f32 %v469, %v1021
    %v1534 = vsub.f32 %v470, %v1022
    %v1535 = vsub.f32 %v471, %v1023
    %v1536 = vsub.f32 %v472, %v1024
    %v1537 = vsub.f32 %v473, %v1025
    %v1538 = vsub.f32 %v474, %v1026
    %v1539 = vsub.f32 %v475, %v1027
    %v1540 = vsub.f32 %v476, %v1028
    %v1541 = vsub.f32 %v477, %v1029
    %v1542 = vsub.f32 %v478, %v1030
    %v1543 = vsub.f32 %v479, %v1031
    %v1544 = vsub.f32 %v480, %v1032
    %v1545 = vsub.f32 %v481, %v1033
    %v1546 = vsub.f32 %v482, %v1034
    %v1547 = vsub.f32 %v483, %v1035
    %v1548 = vsub.f32 %v484, %v1036
    %v1549 = vsub.f32 %v485, %v1037
    %v1550 = vsub.f32 %v486, %v1038
    %v1551 = vsub.f32 %v487, %v1039
    %v1552 = vsub.f32 %v488, %v1040
    %v1553 = vsub.f32 %v489, %v1041
    %v1554 = vsub.f32 %v490, %v1042
    %v1555 = vsub.f32 %v491, %v1043
    %v1556 = vsub.f32 %v492, %v1044
    %v1557 = vsub.f32 %v493, %v1045
    %v1558 = vsub.f32 %v494, %v1046
    %v1559 = vsub.f32 %v495, %v1047
    %v1560 = vsub.f32 %v496, %v1048
    %v1561 = vsub.f32 %v497, %v1049
    %v1562 = vsub.f32 %v498, %v1050
    %v1563 = vsub.f32 %v499, %v1051
    %v1564 = vsub.f32 %v500, %v1052
    %v1565 = vsub.f32 %v501, %v1053
    %v1566 = vsub.f32 %v502, %v1054
    %v1567 = vsub.f32 %v503, %v1055
    %v1568 = vsub.f32 %v504, %v1056
    %v1569 = vsub.f32 %v505, %v1057
    %v1570 = vsub.f32 %v506, %v1058
    %v1571 = vsub.f32 %v507, %v1059
    %v1572 = vsub.f32 %v508, %v1060
    %v1573 = vsub.f32 %v509, %v1061
    %v1574 = vsub.f32 %v510, %v1062
    %v1575 = vsub.f32 %v511, %v1063
    %v1576 = vsub.f32 %v512, %v1064
    %v1577 = vsub.f32 %v513, %v1065
    %v1578 = vsub.f32 %v514, %v1066
    %v1579 = vsub.f32 %v515, %v1067
    %v1580 = vsub.f32 %v516, %v1068
    %v1581 = vsub.f32 %v517, %v1069
    %v1582 = vsub.f32 %v518, %v1070
    %v1583 = vsub.f32 %v519, %v1071
    %v1584 = vsub.f32 %v520, %v1072
    %v1585 = vsub.f32 %v521, %v1073
    %v1586 = vsub.f32 %v522, %v1074
    %v1587 = vsub.f32 %v523, %v1075
    %v1588 = vsub.f32 %v524, %v1076
    %v1589 = vsub.f32 %v525, %v1077
    %v1590 = vsub.f32 %v526, %v1078
    %v1591 = vsub.f32 %v527, %v1079
    %v1592 = vsub.f32 %v528, %v1080
    %v1593 = vsub.f32 %v529, %v1081
    %v1594 = vsub.f32 %v530, %v1082
    %v1595 = vsub.f32 %v531, %v1083
    %v1596 = vsub.f32 %v532, %v1084
    %v1597 = vsub.f32 %v533, %v1085
    %v1598 = vsub.f32 %v534, %v1086
    %v1599 = vsub.f32 %v535, %v1087
    %v1600 = vsub.f32 %v536, %v1088
    %v1601 = vsub.f32 %v537, %v1089
    %v1602 = vsub.f32 %v538, %v1090
    %v1603 = vsub.f32 %v539, %v1091
    %v1604 = vsub.f32 %v540, %v1092
    %v1605 = vsub.f32 %v541, %v1093
    %v1606 = vsub.f32 %v542, %v1094
    %v1607 = vsub.f32 %v543, %v1095
    %v1608 = vsub.f32 %v544, %v1096
    %v1609 = vsub.f32 %v545, %v1097
    %v1610 = vsub.f32 %v546, %v1098
    %v1611 = vsub.f32 %v547, %v1099
    %v1612 = vsub.f32 %v548, %v1100
    %v1613 = vsub.f32 %v549, %v1101
    %v1614 = vsub.f32 %v550, %v1102
    %v1615 = vsub.f32 %v551, %v1103
    %v1616 = vsub.f32 %v552, %v1104
    %v1617 = vsub.f32 %v553, %v1105
    %v1618 = vsub.f32 %v554, %v1106
    %v1619 = vsub.f32 %v555, %v1107
    %v1620 = vsub.f32 %v556, %v1108
    %v1621 = vsub.f32 %v557, %v1109
    %v1622 = vsub.f32 %v558, %v1110
    %v1623 = vsub.f32 %v559, %v1111
    %v1624 = vsub.f32 %v560, %v1112
    %v1625 = vsub.f32 %v561, %v1113
    %v1626 = vsub.f32 %v562, %v1114
    %v1627 = vsub.f32 %v563, %v1115
    %v1628 = vsub.f32 %v564, %v1116
    %v1629 = vsub.f32 %v565, %v1117
    %v1630 = vsub.f32 %v566, %v1118
    %v1631 = vsub.f32 %v567, %v1119
    %v1632 = vsub.f32 %v568, %v1120
    %v1633 = vsub.f32 %v569, %v1121
    %v1634 = vsub.f32 %v570, %v1122
    %v1635 = vsub.f32 %v571, %v1123
    %v1636 = vsub.f32 %v572, %v1124
    %v1637 = vsub.f32 %v573, %v1125
    %v1638 = vsub.f32 %v574, %v1126
    %v1639 = vsub.f32 %v575, %v1127
    %v1640 = vsub.f32 %v576, %v1128
    %v1641 = vsub.f32 %v577, %v1129
    %v1642 = vsub.f32 %v578, %v1130
    %v1643 = vsub.f32 %v579, %v1131
    %v1644 = vsub.f32 %v580, %v1132
    %v1645 = vsub.f32 %v581, %v1133
    %v1646 = vsub.f32 %v582, %v1134
    %v1647 = vsub.f32 %v583, %v1135
    %v1648 = vsub.f32 %v584, %v1136
    %v1649 = vsub.f32 %v585, %v1137
    %v1650 = vsub.f32 %v586, %v1138
    %v1651 = vsub.f32 %v587, %v1139
    %v1652 = vsub.f32 %v588, %v1140
    %v1653 = vsub.f32 %v589, %v1141
    %v1654 = vsub.f32 %v590, %v1142
    %v1655 = vsub.f32 %v591, %v1143
    %v1656 = vsub.f32 %v592, %v1144
    %v1657 = vsub.f32 %v593, %v1145
    %v1658 = vsub.f32 %v594, %v1146
    %v1659 = vsub.f32 %v595, %v1147
    %v1660 = vsub.f32 %v596, %v1148
    %v1661 = vsub.f32 %v597, %v1149
    %v1662 = vsub.f32 %v598, %v1150
    %v1663 = vsub.f32 %v599, %v1151
    %v1664 = vsub.f32 %v600, %v1152
    %v1665 = vsub.f32 %v601, %v1153
    %v1666 = vsub.f32 %v602, %v1154
    %v1667 = vsub.f32 %v603, %v1155
    %v1668 = vsub.f32 %v604, %v1156
    %v1669 = vsub.f32 %v605, %v1157
    %v1670 = vsub.f32 %v606, %v1158
    %v1671 = vsub.f32 %v607, %v1159
    %v1672 = vsub.f32 %v608, %v1160
    %v1673 = vsub.f32 %v609, %v1161
    %v1674 = vsub.f32 %v610, %v1162
    %v1675 = vsub.f32 %v611, %v1163
    %v1676 = vsub.f32 %v612, %v1164
    %v1677 = vsub.f32 %v613, %v1165
    %v1678 = vsub.f32 %v614, %v1166
    %v1679 = vsub.f32 %v615, %v1167
    %v1680 = vsub.f32 %v616, %v1168
    %v1681 = vsub.f32 %v617, %v1169
    %v1682 = vsub.f32 %v618, %v1170
    %v1683 = vsub.f32 %v619, %v1171
    %v1684 = vsub.f32 %v620, %v1172
    %v1685 = vsub.f32 %v621, %v1173
    %v1686 = vsub.f32 %v622, %v1174
    %v1687 = vsub.f32 %v623, %v1175
    %v1688 = vsub.f32 %v624, %v1176
    %v1689 = vsub.f32 %v625, %v1177
    %v1690 = vsub.f32 %v626, %v1178
    %v1691 = vsub.f32 %v627, %v1179
    %v1692 = vsub.f32 %v628, %v1180
    %v1693 = vsub.f32 %v629, %v1181
    %v1694 = vsub.f32 %v630, %v1182
    %v1695 = vsub.f32 %v631, %v1183
    %v1696 = vsub.f32 %v632, %v1184
    %v1697 = vsub.f32 %v633, %v1185
    %v1698 = vsub.f32 %v634, %v1186
    %v1699 = vsub.f32 %v635, %v1187
    %v1700 = vsub.f32 %v636, %v1188
    %v1701 = vsub.f32 %v637, %v1189
    %v1702 = vsub.f32 %v638, %v1190
    %v1703 = vsub.f32 %v639, %v1191
    %v1704 = vsub.f32 %v640, %v1192
    %v1705 = vsub.f32 %v641, %v1193
    %v1706 = vsub.f32 %v642, %v1194
    %v1707 = vsub.f32 %v643, %v1195
    %v1708 = vsub.f32 %v644, %v1196
    %v1709 = vsub.f32 %v645, %v1197
    %v1710 = vsub.f32 %v646, %v1198
    %v1711 = vsub.f32 %v647, %v1199
    %v1712 = vsub.f32 %v648, %v1200
    %v1713 = vsub.f32 %v649, %v1201
    %v1714 = vsub.f32 %v650, %v1202
    %v1715 = vsub.f32 %v651, %v1203
    %v1716 = vsub.f32 %v652, %v1204
    %v1717 = vsub.f32 %v653, %v1205
    %v1718 = vsub.f32 %v654, %v1206
    %v1719 = vsub.f32 %v655, %v1207
    %v1720 = vsub.f32 %v656, %v1208
    %v1721 = vsub.f32 %v657, %v1209
    %v1722 = vsub.f32 %v658, %v1210
    %v1723 = vsub.f32 %v659, %v1211
    %v1724 = vsub.f32 %v660, %v1212
    %v1725 = vsub.f32 %v661, %v1213
    %v1726 = vsub.f32 %v662, %v1214
    %v1727 = vsub.f32 %v663, %v1215
    %v1728 = vsub.f32 %v664, %v1216
    %v1729 = vsub.f32 %v665, %v1217
    %v1730 = vsub.f32 %v666, %v1218
    %v1731 = vsub.f32 %v667, %v1219
    %v1732 = vsub.f32 %v668, %v1220
    %v1733 = vsub.f32 %v669, %v1221
    %v1734 = vsub.f32 %v670, %v1222
    %v1735 = vsub.f32 %v671, %v1223
    %v1736 = vsub.f32 %v672, %v1224
    %v1737 = vsub.f32 %v673, %v1225
    %v1738 = vsub.f32 %v674, %v1226
    %v1739 = vsub.f32 %v675, %v1227
    %v1740 = vsub.f32 %v676, %v1228
    %v1741 = vsub.f32 %v677, %v1229
    %v1742 = vsub.f32 %v678, %v1230
    %v1743 = vsub.f32 %v679, %v1231
    %v1744 = vsub.f32 %v680, %v1232
    %v1745 = vsub.f32 %v681, %v1233
    %v1746 = vsub.f32 %v682, %v1234
    %v1747 = vsub.f32 %v683, %v1235
    %v1748 = vsub.f32 %v684, %v1236
    %v1749 = vsub.f32 %v685, %v1237
    %v1750 = vsub.f32 %v686, %v1238
    %v1751 = vsub.f32 %v687, %v1239
    %v1752 = vsub.f32 %v688, %v1240
    %v1753 = vsub.f32 %v689, %v1241
    %v1754 = vsub.f32 %v690, %v1242
    %v1755 = vsub.f32 %v691, %v1243
    %v1756 = vsub.f32 %v692, %v1244
    %v1757 = vsub.f32 %v693, %v1245
    %v1758 = vsub.f32 %v694, %v1246
    %v1759 = vsub.f32 %v695, %v1247
    %v1760 = vsub.f32 %v696, %v1248
    %v1761 = vsub.f32 %v697, %v1249
    %v1762 = vsub.f32 %v698, %v1250
    %v1763 = vsub.f32 %v699, %v1251
    %v1764 = vsub.f32 %v700, %v1252
    %v1765 = vsub.f32 %v701, %v1253
    %v1766 = vsub.f32 %v702, %v1254
    %v1767 = vsub.f32 %v703, %v1255
    %v1768 = vsub.f32 %v704, %v1256
    %v1769 = vsub.f32 %v705, %v1257
    %v1770 = vsub.f32 %v706, %v1258
    %v1771 = vsub.f32 %v707, %v1259
    %v1772 = vsub.f32 %v708, %v1260
    %v1773 = vsub.f32 %v709, %v1261
    %v1774 = vsub.f32 %v710, %v1262
    %v1775 = vsub.f32 %v711, %v1263
    %v1776 = vsub.f32 %v712, %v1264
    %v1777 = vsub.f32 %v713, %v1265
    %v1778 = vsub.f32 %v714, %v1266
    %v1779 = vsub.f32 %v715, %v1267
    %v1780 = vsub.f32 %v716, %v1268
    %v1781 = vsub.f32 %v717, %v1269
    %v1782 = vsub.f32 %v718, %v1270
    %v1783 = vsub.f32 %v719, %v1271
    %v1784 = vsub.f32 %v720, %v1272
    %v1785 = vsub.f32 %v721, %v1273
    %v1786 = vsub.f32 %v722, %v1274
    %v1787 = vsub.f32 %v723, %v1275
    %v1788 = vsub.f32 %v724, %v1276
    %v1789 = vsub.f32 %v725, %v1277
    %v1790 = vsub.f32 %v726, %v1278
    %v1791 = vsub.f32 %v727, %v1279
    %v1792 = vsub.f32 %v728, %v1280
    %v1793 = vsub.f32 %v729, %v1281
    %v1794 = vsub.f32 %v730, %v1282
    %v1795 = vsub.f32 %v731, %v1283
    %v1796 = vsub.f32 %v732, %v1284
    %v1797 = vsub.f32 %v733, %v1285
    %v1798 = vsub.f32 %v734, %v1286
    %v1799 = vsub.f32 %v735, %v1287
    %v1800 = vsub.f32 %v736, %v1288
    %v1801 = vsub.f32 %v737, %v1289
    %v1802 = vsub.f32 %v738, %v1290
    %v1803 = vsub.f32 %v739, %v1291
    %v1804 = vsub.f32 %v740, %v1292
    %v1805 = vsub.f32 %v741, %v1293
    %v1806 = vsub.f32 %v742, %v1294
    %v1807 = vsub.f32 %v743, %v1295
    %v1808 = vsub.f32 %v744, %v1296
    %v1809 = vsub.f32 %v745, %v1297
    %v1810 = vsub.f32 %v746, %v1298
    %v1811 = vsub.f32 %v747, %v1299
    %v1812 = vsub.f32 %v748, %v1300
    %v1813 = vsub.f32 %v749, %v1301
    %v1814 = vsub.f32 %v750, %v1302
    %v1815 = vsub.f32 %v751, %v1303
    %v1816 = vsub.f32 %v752, %v1304
    %v1817 = vsub.f32 %v753, %v1305
    %v1818 = vsub.f32 %v754, %v1306
    %v1819 = vsub.f32 %v755, %v1307
    %v1820 = vsub.f32 %v756, %v1308
    %v1821 = vsub.f32 %v757, %v1309
    %v1822 = vsub.f32 %v758, %v1310
    %v1823 = vsub.f32 %v759, %v1311
    %v1824 = vsub.f32 %v760, %v1312
    %v1825 = vsub.f32 %v761, %v1313
    %v1826 = vsub.f32 %v762, %v1314
    %v1827 = vsub.f32 %v763, %v1315
    %v1828 = vsub.f32 %v764, %v1316
    %v1829 = vsub.f32 %v765, %v1317
    %v1830 = vsub.f32 %v766, %v1318
    %v1831 = vsub.f32 %v767, %v1319
    %v1832 = vsub.f32 %v768, %v1320
    %v1833 = vsub.f32 %v769, %v1321
    %v1834 = vsub.f32 %v770, %v1322
    %v1835 = vsub.f32 %v771, %v1323
    %v1836 = vsub.f32 %v772, %v1324
    %v1837 = vsub.f32 %v773, %v1325
    %v1838 = vsub.f32 %v774, %v1326
    %v1839 = vsub.f32 %v775, %v1327
    %v1840 = vsub.f32 %v776, %v1328
    %v1841 = vsub.f32 %v777, %v1329
    %v1842 = vsub.f32 %v778, %v1330
    %v1843 = vsub.f32 %v779, %v1331
    %v1844 = vsub.f32 %v780, %v1332
    %v1845 = vsub.f32 %v781, %v1333
    %v1846 = vsub.f32 %v782, %v1334
    %v1847 = vsub.f32 %v783, %v1335
    %v1848 = vsub.f32 %v784, %v1336
    %v1849 = vsub.f32 %v785, %v1337
    %v1850 = vsub.f32 %v786, %v1338
    %v1851 = vsub.f32 %v787, %v1339
    %v1852 = vsub.f32 %v788, %v1340
    %v1853 = vsub.f32 %v789, %v1341
    %v1854 = vsub.f32 %v790, %v1342
    %v1855 = vsub.f32 %v791, %v1343
    %v1856 = vsub.f32 %v792, %v1344
    %v1857 = vsub.f32 %v793, %v1345
    %v1858 = vsub.f32 %v794, %v1346
    %v1859 = vsub.f32 %v795, %v1347
    %v1860 = vsub.f32 %v796, %v1348
    %v1861 = vsub.f32 %v797, %v1349
    %v1862 = vsub.f32 %v798, %v1350
    %v1863 = vsub.f32 %v799, %v1351
    %v1864 = vsub.f32 %v800, %v1352
    %v1865 = vsub.f32 %v801, %v1353
    %v1866 = vsub.f32 %v802, %v1354
    %v1867 = vsub.f32 %v803, %v1355
    %v1868 = vsub.f32 %v804, %v1356
    %v1869 = vsub.f32 %v805, %v1357
    %v1870 = vsub.f32 %v806, %v1358
    %v1871 = vsub.f32 %v807, %v1359
    %v1872 = vsub.f32 %v808, %v1360
    %v1873 = vsub.f32 %v809, %v1361
    %v1874 = vsub.f32 %v810, %v1362
    %v1875 = vsub.f32 %v811, %v1363
    %v1876 = vsub.f32 %v812, %v1364
    %v1877 = vsub.f32 %v813, %v1365
    %v1878 = vsub.f32 %v814, %v1366
    %v1879 = vsub.f32 %v815, %v1367
    %v1880 = vsub.f32 %v816, %v1368
    %v1881 = vsub.f32 %v817, %v1369
    %v1882 = vsub.f32 %v818, %v1370
    %v1883 = vsub.f32 %v819, %v1371
    %v1884 = vsub.f32 %v820, %v1372
    %v1885 = vsub.f32 %v821, %v1373
    %v1886 = vsub.f32 %v822, %v1374
    %v1887 = vsub.f32 %v823, %v1375
    %v1888 = vsub.f32 %v824, %v1376
    %v1889 = vsub.f32 %v825, %v1377
    %v1890 = vsub.f32 %v826, %v1378
    %v1891 = vsub.f32 %v827, %v1379
    %v1892 = vsub.f32 %v828, %v1380
    %v1893 = vsub.f32 %v829, %v1381
    %v1894 = vsub.f32 %v830, %v1382
    %v1895 = vsub.f32 %v831, %v1383
    %v1896 = vsub.f32 %v832, %v1384
    %v1897 = vsub.f32 %v833, %v1385
    %v1898 = vsub.f32 %v834, %v1386
    %v1899 = vsub.f32 %v835, %v1387
    %v1900 = vsub.f32 %v836, %v1388
    %v1901 = vsub.f32 %v837, %v1389
    %v1902 = vsub.f32 %v838, %v1390
    %v1903 = vsub.f32 %v839, %v1391
    %v1904 = vsub.f32 %v840, %v1392
    %v1905 = vsub.f32 %v841, %v1393
    %v1906 = vsub.f32 %v842, %v1394
    %v1907 = vsub.f32 %v843, %v1395
    %v1908 = vsub.f32 %v844, %v1396
    %v1909 = vsub.f32 %v845, %v1397
    %v1910 = vsub.f32 %v846, %v1398
    %v1911 = vsub.f32 %v847, %v1399
    %v1912 = vsub.f32 %v848, %v1400
    %v1913 = vsub.f32 %v849, %v1401
    %v1914 = vsub.f32 %v850, %v1402
    %v1915 = vsub.f32 %v851, %v1403
    %v1916 = vsub.f32 %v852, %v1404
    %v1917 = vsub.f32 %v853, %v1405
    %v1918 = vsub.f32 %v854, %v1406
    %v1919 = vsub.f32 %v855, %v1407
    %v1920 = vsub.f32 %v856, %v1408
    %v1921 = vsub.f32 %v857, %v1409
    %v1922 = vsub.f32 %v858, %v1410
    %v1923 = vsub.f32 %v859, %v1411
    %v1924 = vsub.f32 %v860, %v1412
    %v1925 = vsub.f32 %v861, %v1413
    %v1926 = vsub.f32 %v862, %v1414
    %v1927 = vsub.f32 %v863, %v1415
    %v1928 = vsub.f32 %v864, %v1416
    %v1929 = vsub.f32 %v865, %v1417
    %v1930 = vsub.f32 %v866, %v1418
    %v1931 = vsub.f32 %v867, %v1419
    %v1932 = vsub.f32 %v868, %v1420
    %v1933 = vsub.f32 %v869, %v1421
    %v1934 = vsub.f32 %v870, %v1422
    %v1935 = vsub.f32 %v871, %v1423
    %v1936 = vsub.f32 %v872, %v1424
    %v1937 = vsub.f32 %v873, %v1425
    %v1938 = vsub.f32 %v874, %v1426
    %v1939 = vsub.f32 %v875, %v1427
    %v1940 = vsub.f32 %v876, %v1428
    %v1941 = vsub.f32 %v877, %v1429
    %v1942 = vsub.f32 %v878, %v1430
    %v1943 = vsub.f32 %v879, %v1431
    %v1944 = vsub.f32 %v880, %v1432
    %v1945 = vadd.f32 %v1433, %v265
    %v1946 = vadd.f32 %v1434, %v266
    %v1947 = vadd.f32 %v1435, %v267
    %v1948 = vadd.f32 %v1436, %v268
    %v1949 = vadd.f32 %v1437, %v269
    %v1950 = vadd.f32 %v1438, %v270
    %v1951 = vadd.f32 %v1439, %v271
    %v1952 = vadd.f32 %v1440, %v272
    %v1953 = vadd.f32 %v1441, %v273
    %v1954 = vadd.f32 %v1442, %v274
    %v1955 = vadd.f32 %v1443, %v275
    %v1956 = vadd.f32 %v1444, %v276
    %v1957 = vadd.f32 %v1445, %v277
    %v1958 = vadd.f32 %v1446, %v278
    %v1959 = vadd.f32 %v1447, %v279
    %v1960 = vadd.f32 %v1448, %v280
    %v1961 = vadd.f32 %v1449, %v281
    %v1962 = vadd.f32 %v1450, %v282
    %v1963 = vadd.f32 %v1451, %v283
    %v1964 = vadd.f32 %v1452, %v284
    %v1965 = vadd.f32 %v1453, %v285
    %v1966 = vadd.f32 %v1454, %v286
    %v1967 = vadd.f32 %v1455, %v287
    %v1968 = vadd.f32 %v1456, %v288
    %v1969 = vadd.f32 %v1457, %v289
    %v1970 = vadd.f32 %v1458, %v290
    %v1971 = vadd.f32 %v1459, %v291
    %v1972 = vadd.f32 %v1460, %v292
    %v1973 = vadd.f32 %v1461, %v293
    %v1974 = vadd.f32 %v1462, %v294
    %v1975 = vadd.f32 %v1463, %v295
    %v1976 = vadd.f32 %v1464, %v296
    %v1977 = vadd.f32 %v1465, %v297
    %v1978 = vadd.f32 %v1466, %v298
    %v1979 = vadd.f32 %v1467, %v299
    %v1980 = vadd.f32 %v1468, %v300
    %v1981 = vadd.f32 %v1469, %v301
    %v1982 = vadd.f32 %v1470, %v302
    %v1983 = vadd.f32 %v1471, %v303
    %v1984 = vadd.f32 %v1472, %v304
    %v1985 = vadd.f32 %v1473, %v305
    %v1986 = vadd.f32 %v1474, %v306
    %v1987 = vadd.f32 %v1475, %v307
    %v1988 = vadd.f32 %v1476, %v308
    %v1989 = vadd.f32 %v1477, %v309
    %v1990 = vadd.f32 %v1478, %v310
    %v1991 = vadd.f32 %v1479, %v311
    %v1992 = vadd.f32 %v1480, %v312
    %v1993 = vadd.f32 %v1481, %v313
    %v1994 = vadd.f32 %v1482, %v314
    %v1995 = vadd.f32 %v1483, %v315
    %v1996 = vadd.f32 %v1484, %v316
    %v1997 = vadd.f32 %v1485, %v317
    %v1998 = vadd.f32 %v1486, %v318
    %v1999 = vadd.f32 %v1487, %v319
    %v2000 = vadd.f32 %v1488, %v320
    %v2001 = vadd.f32 %v1489, %v321
    %v2002 = vadd.f32 %v1490, %v322
    %v2003 = vadd.f32 %v1491, %v323
    %v2004 = vadd.f32 %v1492, %v324
    %v2005 = vadd.f32 %v1493, %v325
    %v2006 = vadd.f32 %v1494, %v326
    %v2007 = vadd.f32 %v1495, %v327
    %v2008 = vadd.f32 %v1496, %v328
    %v2009 = vadd.f32 %v1497, %v265
    %v2010 = vadd.f32 %v1498, %v266
    %v2011 = vadd.f32 %v1499, %v267
    %v2012 = vadd.f32 %v1500, %v268
    %v2013 = vadd.f32 %v1501, %v269
    %v2014 = vadd.f32 %v1502, %v270
    %v2015 = vadd.f32 %v1503, %v271
    %v2016 = vadd.f32 %v1504, %v272
    %v2017 = vadd.f32 %v1505, %v273
    %v2018 = vadd.f32 %v1506, %v274
    %v2019 = vadd.f32 %v1507, %v275
    %v2020 = vadd.f32 %v1508, %v276
    %v2021 = vadd.f32 %v1509, %v277
    %v2022 = vadd.f32 %v1510, %v278
    %v2023 = vadd.f32 %v1511, %v279
    %v2024 = vadd.f32 %v1512, %v280
    %v2025 = vadd.f32 %v1513, %v281
    %v2026 = vadd.f32 %v1514, %v282
    %v2027 = vadd.f32 %v1515, %v283
    %v2028 = vadd.f32 %v1516, %v284
    %v2029 = vadd.f32 %v1517, %v285
    %v2030 = vadd.f32 %v1518, %v286
    %v2031 = vadd.f32 %v1519, %v287
    %v2032 = vadd.f32 %v1520, %v288
    %v2033 = vadd.f32 %v1521, %v289
    %v2034 = vadd.f32 %v1522, %v290
    %v2035 = vadd.f32 %v1523, %v291
    %v2036 = vadd.f32 %v1524, %v292
    %v2037 = vadd.f32 %v1525, %v293
    %v2038 = vadd.f32 %v1526, %v294
    %v2039 = vadd.f32 %v1527, %v295
    %v2040 = vadd.f32 %v1528, %v296
    %v2041 = vadd.f32 %v1529, %v297
    %v2042 = vadd.f32 %v1530, %v298
    %v2043 = vadd.f32 %v1531, %v299
    %v2044 = vadd.f32 %v1532, %v300
    %v2045 = vadd.f32 %v1533, %v301
    %v2046 = vadd.f32 %v1534, %v302
    %v2047 = vadd.f32 %v1535, %v303
    %v2048 = vadd.f32 %v1536, %v304
    %v2049 = vadd.f32 %v1537, %v305
    %v2050 = vadd.f32 %v1538, %v306
    %v2051 = vadd.f32 %v1539, %v307
    %v2052 = vadd.f32 %v1540, %v308
    %v2053 = vadd.f32 %v1541, %v309
    %v2054 = vadd.f32 %v1542, %v310
    %v2055 = vadd.f32 %v1543, %v311
    %v2056 = vadd.f32 %v1544, %v312
    %v2057 = vadd.f32 %v1545, %v313
    %v2058 = vadd.f32 %v1546, %v314
    %v2059 = vadd.f32 %v1547, %v315
    %v2060 = vadd.f32 %v1548, %v316
    %v2061 = vadd.f32 %v1549, %v317
    %v2062 = vadd.f32 %v1550, %v318
    %v2063 = vadd.f32 %v1551, %v319
    %v2064 = vadd.f32 %v1552, %v320
    %v2065 = vadd.f32 %v1553, %v321
    %v2066 = vadd.f32 %v1554, %v322
    %v2067 = vadd.f32 %v1555, %v323
    %v2068 = vadd.f32 %v1556, %v324
    %v2069 = vadd.f32 %v1557, %v325
    %v2070 = vadd.f32 %v1558, %v326
    %v2071 = vadd.f32 %v1559, %v327
    %v2072 = vadd.f32 %v1560, %v328
    %v2073 = vadd.f32 %v1561, %v265
    %v2074 = vadd.f32 %v1562, %v266
    %v2075 = vadd.f32 %v1563, %v267
    %v2076 = vadd.f32 %v1564, %v268
    %v2077 = vadd.f32 %v1565, %v269
    %v2078 = vadd.f32 %v1566, %v270
    %v2079 = vadd.f32 %v1567, %v271
    %v2080 = vadd.f32 %v1568, %v272
    %v2081 = vadd.f32 %v1569, %v273
    %v2082 = vadd.f32 %v1570, %v274
    %v2083 = vadd.f32 %v1571, %v275
    %v2084 = vadd.f32 %v1572, %v276
    %v2085 = vadd.f32 %v1573, %v277
    %v2086 = vadd.f32 %v1574, %v278
    %v2087 = vadd.f32 %v1575, %v279
    %v2088 = vadd.f32 %v1576, %v280
    %v2089 = vadd.f32 %v1577, %v281
    %v2090 = vadd.f32 %v1578, %v282
    %v2091 = vadd.f32 %v1579, %v283
    %v2092 = vadd.f32 %v1580, %v284
    %v2093 = vadd.f32 %v1581, %v285
    %v2094 = vadd.f32 %v1582, %v286
    %v2095 = vadd.f32 %v1583, %v287
    %v2096 = vadd.f32 %v1584, %v288
    %v2097 = vadd.f32 %v1585, %v289
    %v2098 = vadd.f32 %v1586, %v290
    %v2099 = vadd.f32 %v1587, %v291
    %v2100 = vadd.f32 %v1588, %v292
    %v2101 = vadd.f32 %v1589, %v293
    %v2102 = vadd.f32 %v1590, %v294
    %v2103 = vadd.f32 %v1591, %v295
    %v2104 = vadd.f32 %v1592, %v296
    %v2105 = vadd.f32 %v1593, %v297
    %v2106 = vadd.f32 %v1594, %v298
    %v2107 = vadd.f32 %v1595, %v299
    %v2108 = vadd.f32 %v1596, %v300
    %v2109 = vadd.f32 %v1597, %v301
    %v2110 = vadd.f32 %v1598, %v302
    %v2111 = vadd.f32 %v1599, %v303
    %v2112 = vadd.f32 %v1600, %v304
    %v2113 = vadd.f32 %v1601, %v305
    %v2114 = vadd.f32 %v1602, %v306
    %v2115 = vadd.f32 %v1603, %v307
    %v2116 = vadd.f32 %v1604, %v308
    %v2117 = vadd.f32 %v1605, %v309
    %v2118 = vadd.f32 %v1606, %v310
    %v2119 = vadd.f32 %v1607, %v311
    %v2120 = vadd.f32 %v1608, %v312
    %v2121 = vadd.f32 %v1609, %v313
    %v2122 = vadd.f32 %v1610, %v314
    %v2123 = vadd.f32 %v1611, %v315
    %v2124 = vadd.f32 %v1612, %v316
    %v2125 = vadd.f32 %v1613, %v317
    %v2126 = vadd.f32 %v1614, %v318
    %v2127 = vadd.f32 %v1615, %v319
    %v2128 = vadd.f32 %v1616, %v320
    %v2129 = vadd.f32 %v1617, %v321
    %v2130 = vadd.f32 %v1618, %v322
    %v2131 = vadd.f32 %v1619, %v323
    %v2132 = vadd.f32 %v1620, %v324
    %v2133 = vadd.f32 %v1621, %v325
    %v2134 = vadd.f32 %v1622, %v326
    %v2135 = vadd.f32 %v1623, %v327
    %v2136 = vadd.f32 %v1624, %v328
    %v2137 = vadd.f32 %v1625, %v265
    %v2138 = vadd.f32 %v1626, %v266
    %v2139 = vadd.f32 %v1627, %v267
    %v2140 = vadd.f32 %v1628, %v268
    %v2141 = vadd.f32 %v1629, %v269
    %v2142 = vadd.f32 %v1630, %v270
    %v2143 = vadd.f32 %v1631, %v271
    %v2144 = vadd.f32 %v1632, %v272
    %v2145 = vadd.f32 %v1633, %v273
    %v2146 = vadd.f32 %v1634, %v274
    %v2147 = vadd.f32 %v1635, %v275
    %v2148 = vadd.f32 %v1636, %v276
    %v2149 = vadd.f32 %v1637, %v277
    %v2150 = vadd.f32 %v1638, %v278
    %v2151 = vadd.f32 %v1639, %v279
    %v2152 = vadd.f32 %v1640, %v280
    %v2153 = vadd.f32 %v1641, %v281
    %v2154 = vadd.f32 %v1642, %v282
    %v2155 = vadd.f32 %v1643, %v283
    %v2156 = vadd.f32 %v1644, %v284
    %v2157 = vadd.f32 %v1645, %v285
    %v2158 = vadd.f32 %v1646, %v286
    %v2159 = vadd.f32 %v1647, %v287
    %v2160 = vadd.f32 %v1648, %v288
    %v2161 = vadd.f32 %v1649, %v289
    %v2162 = vadd.f32 %v1650, %v290
    %v2163 = vadd.f32 %v1651, %v291
    %v2164 = vadd.f32 %v1652, %v292
    %v2165 = vadd.f32 %v1653, %v293
    %v2166 = vadd.f32 %v1654, %v294
    %v2167 = vadd.f32 %v1655, %v295
    %v2168 = vadd.f32 %v1656, %v296
    %v2169 = vadd.f32 %v1657, %v297
    %v2170 = vadd.f32 %v1658, %v298
    %v2171 = vadd.f32 %v1659, %v299
    %v2172 = vadd.f32 %v1660, %v300
    %v2173 = vadd.f32 %v1661, %v301
    %v2174 = vadd.f32 %v1662, %v302
    %v2175 = vadd.f32 %v1663, %v303
    %v2176 = vadd.f32 %v1664, %v304
    %v2177 = vadd.f32 %v1665, %v305
    %v2178 = vadd.f32 %v1666, %v306
    %v2179 = vadd.f32 %v1667, %v307
    %v2180 = vadd.f32 %v1668, %v308
    %v2181 = vadd.f32 %v1669, %v309
    %v2182 = vadd.f32 %v1670, %v310
    %v2183 = vadd.f32 %v1671, %v311
    %v2184 = vadd.f32 %v1672, %v312
    %v2185 = vadd.f32 %v1673, %v313
    %v2186 = vadd.f32 %v1674, %v314
    %v2187 = vadd.f32 %v1675, %v315
    %v2188 = vadd.f32 %v1676, %v316
    %v2189 = vadd.f32 %v1677, %v317
    %v2190 = vadd.f32 %v1678, %v318
    %v2191 = vadd.f32 %v1679, %v319
    %v2192 = vadd.f32 %v1680, %v320
    %v2193 = vadd.f32 %v1681, %v321
    %v2194 = vadd.f32 %v1682, %v322
    %v2195 = vadd.f32 %v1683, %v323
    %v2196 = vadd.f32 %v1684, %v324
    %v2197 = vadd.f32 %v1685, %v325
    %v2198 = vadd.f32 %v1686, %v326
    %v2199 = vadd.f32 %v1687, %v327
    %v2200 = vadd.f32 %v1688, %v328
    %v2201 = vadd.f32 %v1689, %v265
    %v2202 = vadd.f32 %v1690, %v266
    %v2203 = vadd.f32 %v1691, %v267
    %v2204 = vadd.f32 %v1692, %v268
    %v2205 = vadd.f32 %v1693, %v269
    %v2206 = vadd.f32 %v1694, %v270
    %v2207 = vadd.f32 %v1695, %v271
    %v2208 = vadd.f32 %v1696, %v272
    %v2209 = vadd.f32 %v1697, %v273
    %v2210 = vadd.f32 %v1698, %v274
    %v2211 = vadd.f32 %v1699, %v275
    %v2212 = vadd.f32 %v1700, %v276
    %v2213 = vadd.f32 %v1701, %v277
    %v2214 = vadd.f32 %v1702, %v278
    %v2215 = vadd.f32 %v1703, %v279
    %v2216 = vadd.f32 %v1704, %v280
    %v2217 = vadd.f32 %v1705, %v281
    %v2218 = vadd.f32 %v1706, %v282
    %v2219 = vadd.f32 %v1707, %v283
    %v2220 = vadd.f32 %v1708, %v284
    %v2221 = vadd.f32 %v1709, %v285
    %v2222 = vadd.f32 %v1710, %v286
    %v2223 = vadd.f32 %v1711, %v287
    %v2224 = vadd.f32 %v1712, %v288
    %v2225 = vadd.f32 %v1713, %v289
    %v2226 = vadd.f32 %v1714, %v290
    %v2227 = vadd.f32 %v1715, %v291
    %v2228 = vadd.f32 %v1716, %v292
    %v2229 = vadd.f32 %v1717, %v293
    %v2230 = vadd.f32 %v1718, %v294
    %v2231 = vadd.f32 %v1719, %v295
    %v2232 = vadd.f32 %v1720, %v296
    %v2233 = vadd.f32 %v1721, %v297
    %v2234 = vadd.f32 %v1722, %v298
    %v2235 = vadd.f32 %v1723, %v299
    %v2236 = vadd.f32 %v1724, %v300
    %v2237 = vadd.f32 %v1725, %v301
    %v2238 = vadd.f32 %v1726, %v302
    %v2239 = vadd.f32 %v1727, %v303
    %v2240 = vadd.f32 %v1728, %v304
    %v2241 = vadd.f32 %v1729, %v305
    %v2242 = vadd.f32 %v1730, %v306
    %v2243 = vadd.f32 %v1731, %v307
    %v2244 = vadd.f32 %v1732, %v308
    %v2245 = vadd.f32 %v1733, %v309
    %v2246 = vadd.f32 %v1734, %v310
    %v2247 = vadd.f32 %v1735, %v311
    %v2248 = vadd.f32 %v1736, %v312
    %v2249 = vadd.f32 %v1737, %v313
    %v2250 = vadd.f32 %v1738, %v314
    %v2251 = vadd.f32 %v1739, %v315
    %v2252 = vadd.f32 %v1740, %v316
    %v2253 = vadd.f32 %v1741, %v317
    %v2254 = vadd.f32 %v1742, %v318
    %v2255 = vadd.f32 %v1743, %v319
    %v2256 = vadd.f32 %v1744, %v320
    %v2257 = vadd.f32 %v1745, %v321
    %v2258 = vadd.f32 %v1746, %v322
    %v2259 = vadd.f32 %v1747, %v323
    %v2260 = vadd.f32 %v1748, %v324
    %v2261 = vadd.f32 %v1749, %v325
    %v2262 = vadd.f32 %v1750, %v326
    %v2263 = vadd.f32 %v1751, %v327
    %v2264 = vadd.f32 %v1752, %v328
    %v2265 = vadd.f32 %v1753, %v265
    %v2266 = vadd.f32 %v1754, %v266
    %v2267 = vadd.f32 %v1755, %v267
    %v2268 = vadd.f32 %v1756, %v268
    %v2269 = vadd.f32 %v1757, %v269
    %v2270 = vadd.f32 %v1758, %v270
    %v2271 = vadd.f32 %v1759, %v271
    %v2272 = vadd.f32 %v1760, %v272
    %v2273 = vadd.f32 %v1761, %v273
    %v2274 = vadd.f32 %v1762, %v274
    %v2275 = vadd.f32 %v1763, %v275
    %v2276 = vadd.f32 %v1764, %v276
    %v2277 = vadd.f32 %v1765, %v277
    %v2278 = vadd.f32 %v1766, %v278
    %v2279 = vadd.f32 %v1767, %v279
    %v2280 = vadd.f32 %v1768, %v280
    %v2281 = vadd.f32 %v1769, %v281
    %v2282 = vadd.f32 %v1770, %v282
    %v2283 = vadd.f32 %v1771, %v283
    %v2284 = vadd.f32 %v1772, %v284
    %v2285 = vadd.f32 %v1773, %v285
    %v2286 = vadd.f32 %v1774, %v286
    %v2287 = vadd.f32 %v1775, %v287
    %v2288 = vadd.f32 %v1776, %v288
    %v2289 = vadd.f32 %v1777, %v289
    %v2290 = vadd.f32 %v1778, %v290
    %v2291 = vadd.f32 %v1779, %v291
    %v2292 = vadd.f32 %v1780, %v292
    %v2293 = vadd.f32 %v1781, %v293
    %v2294 = vadd.f32 %v1782, %v294
    %v2295 = vadd.f32 %v1783, %v295
    %v2296 = vadd.f32 %v1784, %v296
    %v2297 = vadd.f32 %v1785, %v297
    %v2298 = vadd.f32 %v1786, %v298
    %v2299 = vadd.f32 %v1787, %v299
    %v2300 = vadd.f32 %v1788, %v300
    %v2301 = vadd.f32 %v1789, %v301
    %v2302 = vadd.f32 %v1790, %v302
    %v2303 = vadd.f32 %v1791, %v303
    %v2304 = vadd.f32 %v1792, %v304
    %v2305 = vadd.f32 %v1793, %v305
    %v2306 = vadd.f32 %v1794, %v306
    %v2307 = vadd.f32 %v1795, %v307
    %v2308 = vadd.f32 %v1796, %v308
    %v2309 = vadd.f32 %v1797, %v309
    %v2310 = vadd.f32 %v1798, %v310
    %v2311 = vadd.f32 %v1799, %v311
    %v2312 = vadd.f32 %v1800, %v312
    %v2313 = vadd.f32 %v1801, %v313
    %v2314 = vadd.f32 %v1802, %v314
    %v2315 = vadd.f32 %v1803, %v315
    %v2316 = vadd.f32 %v1804, %v316
    %v2317 = vadd.f32 %v1805, %v317
    %v2318 = vadd.f32 %v1806, %v318
    %v2319 = vadd.f32 %v1807, %v319
    %v2320 = vadd.f32 %v1808, %v320
    %v2321 = vadd.f32 %v1809, %v321
    %v2322 = vadd.f32 %v1810, %v322
    %v2323 = vadd.f32 %v1811, %v323
    %v2324 = vadd.f32 %v1812, %v324
    %v2325 = vadd.f32 %v1813, %v325
    %v2326 = vadd.f32 %v1814, %v326
    %v2327 = vadd.f32 %v1815, %v327
    %v2328 = vadd.f32 %v1816, %v328
    %v2329 = vadd.f32 %v1817, %v265
    %v2330 = vadd.f32 %v1818, %v266
    %v2331 = vadd.f32 %v1819, %v267
    %v2332 = vadd.f32 %v1820, %v268
    %v2333 = vadd.f32 %v1821, %v269
    %v2334 = vadd.f32 %v1822, %v270
    %v2335 = vadd.f32 %v1823, %v271
    %v2336 = vadd.f32 %v1824, %v272
    %v2337 = vadd.f32 %v1825, %v273
    %v2338 = vadd.f32 %v1826, %v274
    %v2339 = vadd.f32 %v1827, %v275
    %v2340 = vadd.f32 %v1828, %v276
    %v2341 = vadd.f32 %v1829, %v277
    %v2342 = vadd.f32 %v1830, %v278
    %v2343 = vadd.f32 %v1831, %v279
    %v2344 = vadd.f32 %v1832, %v280
    %v2345 = vadd.f32 %v1833, %v281
    %v2346 = vadd.f32 %v1834, %v282
    %v2347 = vadd.f32 %v1835, %v283
    %v2348 = vadd.f32 %v1836, %v284
    %v2349 = vadd.f32 %v1837, %v285
    %v2350 = vadd.f32 %v1838, %v286
    %v2351 = vadd.f32 %v1839, %v287
    %v2352 = vadd.f32 %v1840, %v288
    %v2353 = vadd.f32 %v1841, %v289
    %v2354 = vadd.f32 %v1842, %v290
    %v2355 = vadd.f32 %v1843, %v291
    %v2356 = vadd.f32 %v1844, %v292
    %v2357 = vadd.f32 %v1845, %v293
    %v2358 = vadd.f32 %v1846, %v294
    %v2359 = vadd.f32 %v1847, %v295
    %v2360 = vadd.f32 %v1848, %v296
    %v2361 = vadd.f32 %v1849, %v297
    %v2362 = vadd.f32 %v1850, %v298
    %v2363 = vadd.f32 %v1851, %v299
    %v2364 = vadd.f32 %v1852, %v300
    %v2365 = vadd.f32 %v1853, %v301
    %v2366 = vadd.f32 %v1854, %v302
    %v2367 = vadd.f32 %v1855, %v303
    %v2368 = vadd.f32 %v1856, %v304
    %v2369 = vadd.f32 %v1857, %v305
    %v2370 = vadd.f32 %v1858, %v306
    %v2371 = vadd.f32 %v1859, %v307
    %v2372 = vadd.f32 %v1860, %v308
    %v2373 = vadd.f32 %v1861, %v309
    %v2374 = vadd.f32 %v1862, %v310
    %v2375 = vadd.f32 %v1863, %v311
    %v2376 = vadd.f32 %v1864, %v312
    %v2377 = vadd.f32 %v1865, %v313
    %v2378 = vadd.f32 %v1866, %v314
    %v2379 = vadd.f32 %v1867, %v315
    %v2380 = vadd.f32 %v1868, %v316
    %v2381 = vadd.f32 %v1869, %v317
    %v2382 = vadd.f32 %v1870, %v318
    %v2383 = vadd.f32 %v1871, %v319
    %v2384 = vadd.f32 %v1872, %v320
    %v2385 = vadd.f32 %v1873, %v321
    %v2386 = vadd.f32 %v1874, %v322
    %v2387 = vadd.f32 %v1875, %v323
    %v2388 = vadd.f32 %v1876, %v324
    %v2389 = vadd.f32 %v1877, %v325
    %v2390 = vadd.f32 %v1878, %v326
    %v2391 = vadd.f32 %v1879, %v327
    %v2392 = vadd.f32 %v1880, %v328
    %v2393 = vadd.f32 %v1881, %v265
    %v2394 = vadd.f32 %v1882, %v266
    %v2395 = vadd.f32 %v1883, %v267
    %v2396 = vadd.f32 %v1884, %v268
    %v2397 = vadd.f32 %v1885, %v269
    %v2398 = vadd.f32 %v1886, %v270
    %v2399 = vadd.f32 %v1887, %v271
    %v2400 = vadd.f32 %v1888, %v272
    %v2401 = vadd.f32 %v1889, %v273
    %v2402 = vadd.f32 %v1890, %v274
    %v2403 = vadd.f32 %v1891, %v275
    %v2404 = vadd.f32 %v1892, %v276
    %v2405 = vadd.f32 %v1893, %v277
    %v2406 = vadd.f32 %v1894, %v278
    %v2407 = vadd.f32 %v1895, %v279
    %v2408 = vadd.f32 %v1896, %v280
    %v2409 = vadd.f32 %v1897, %v281
    %v2410 = vadd.f32 %v1898, %v282
    %v2411 = vadd.f32 %v1899, %v283
    %v2412 = vadd.f32 %v1900, %v284
    %v2413 = vadd.f32 %v1901, %v285
    %v2414 = vadd.f32 %v1902, %v286
    %v2415 = vadd.f32 %v1903, %v287
    %v2416 = vadd.f32 %v1904, %v288
    %v2417 = vadd.f32 %v1905, %v289
    %v2418 = vadd.f32 %v1906, %v290
    %v2419 = vadd.f32 %v1907, %v291
    %v2420 = vadd.f32 %v1908, %v292
    %v2421 = vadd.f32 %v1909, %v293
    %v2422 = vadd.f32 %v1910, %v294
    %v2423 = vadd.f32 %v1911, %v295
    %v2424 = vadd.f32 %v1912, %v296
    %v2425 = vadd.f32 %v1913, %v297
    %v2426 = vadd.f32 %v1914, %v298
    %v2427 = vadd.f32 %v1915, %v299
    %v2428 = vadd.f32 %v1916, %v300
    %v2429 = vadd.f32 %v1917, %v301
    %v2430 = vadd.f32 %v1918, %v302
    %v2431 = vadd.f32 %v1919, %v303
    %v2432 = vadd.f32 %v1920, %v304
    %v2433 = vadd.f32 %v1921, %v305
    %v2434 = vadd.f32 %v1922, %v306
    %v2435 = vadd.f32 %v1923, %v307
    %v2436 = vadd.f32 %v1924, %v308
    %v2437 = vadd.f32 %v1925, %v309
    %v2438 = vadd.f32 %v1926, %v310
    %v2439 = vadd.f32 %v1927, %v311
    %v2440 = vadd.f32 %v1928, %v312
    %v2441 = vadd.f32 %v1929, %v313
    %v2442 = vadd.f32 %v1930, %v314
    %v2443 = vadd.f32 %v1931, %v315
    %v2444 = vadd.f32 %v1932, %v316
    %v2445 = vadd.f32 %v1933, %v317
    %v2446 = vadd.f32 %v1934, %v318
    %v2447 = vadd.f32 %v1935, %v319
    %v2448 = vadd.f32 %v1936, %v320
    %v2449 = vadd.f32 %v1937, %v321
    %v2450 = vadd.f32 %v1938, %v322
    %v2451 = vadd.f32 %v1939, %v323
    %v2452 = vadd.f32 %v1940, %v324
    %v2453 = vadd.f32 %v1941, %v325
    %v2454 = vadd.f32 %v1942, %v326
    %v2455 = vadd.f32 %v1943, %v327
    %v2456 = vadd.f32 %v1944, %v328
    %2457 = vst [vmem:[#allocation5] sm:$0xff] %v1945
    %2458 = vst [vmem:[#allocation5 + $0x8] sm:$0xff] %v1946
    %2459 = vst [vmem:[#allocation5 + $0x10] sm:$0xff] %v1947
    %2460 = vst [vmem:[#allocation5 + $0x18] sm:$0xff] %v1948
    %2461 = vst [vmem:[#allocation5 + $0x20] sm:$0xff] %v1949
    %2462 = vst [vmem:[#allocation5 + $0x28] sm:$0xff] %v1950
    %2463 = vst [vmem:[#allocation5 + $0x30] sm:$0xff] %v1951
    %2464 = vst [vmem:[#allocation5 + $0x38] sm:$0xff] %v1952
    %2465 = vst [vmem:[#allocation5 + $0x40] sm:$0xff] %v1953
    %2466 = vst [vmem:[#allocation5 + $0x48] sm:$0xff] %v1954
    %2467 = vst [vmem:[#allocation5 + $0x50] sm:$0xff] %v1955
    %2468 = vst [vmem:[#allocation5 + $0x58] sm:$0xff] %v1956
    %2469 = vst [vmem:[#allocation5 + $0x60] sm:$0xff] %v1957
    %2470 = vst [vmem:[#allocation5 + $0x68] sm:$0xff] %v1958
    %2471 = vst [vmem:[#allocation5 + $0x70] sm:$0xff] %v1959
    %2472 = vst [vmem:[#allocation5 + $0x78] sm:$0xff] %v1960
    %2473 = vst [vmem:[#allocation5 + $0x80] sm:$0xff] %v1961
    %2474 = vst [vmem:[#allocation5 + $0x88] sm:$0xff] %v1962
    %2475 = vst [vmem:[#allocation5 + $0x90] sm:$0xff] %v1963
    %2476 = vst [vmem:[#allocation5 + $0x98] sm:$0xff] %v1964
    %2477 = vst [vmem:[#allocation5 + $0xa0] sm:$0xff] %v1965
    %2478 = vst [vmem:[#allocation5 + $0xa8] sm:$0xff] %v1966
    %2479 = vst [vmem:[#allocation5 + $0xb0] sm:$0xff] %v1967
    %2480 = vst [vmem:[#allocation5 + $0xb8] sm:$0xff] %v1968
    %2481 = vst [vmem:[#allocation5 + $0xc0] sm:$0xff] %v1969
    %2482 = vst [vmem:[#allocation5 + $0xc8] sm:$0xff] %v1970
    %2483 = vst [vmem:[#allocation5 + $0xd0] sm:$0xff] %v1971
    %2484 = vst [vmem:[#allocation5 + $0xd8] sm:$0xff] %v1972
    %2485 = vst [vmem:[#allocation5 + $0xe0] sm:$0xff] %v1973
    %2486 = vst [vmem:[#allocation5 + $0xe8] sm:$0xff] %v1974
    %2487 = vst [vmem:[#allocation5 + $0xf0] sm:$0xff] %v1975
    %2488 = vst [vmem:[#allocation5 + $0xf8] sm:$0xff] %v1976
    %2489 = vst [vmem:[#allocation5 + $0x100] sm:$0xff] %v1977
    %2490 = vst [vmem:[#allocation5 + $0x108] sm:$0xff] %v1978
    %2491 = vst [vmem:[#allocation5 + $0x110] sm:$0xff] %v1979
    %2492 = vst [vmem:[#allocation5 + $0x118] sm:$0xff] %v1980
    %2493 = vst [vmem:[#allocation5 + $0x120] sm:$0xff] %v1981
    %2494 = vst [vmem:[#allocation5 + $0x128] sm:$0xff] %v1982
    %2495 = vst [vmem:[#allocation5 + $0x130] sm:$0xff] %v1983
    %2496 = vst [vmem:[#allocation5 + $0x138] sm:$0xff] %v1984
    %2497 = vst [vmem:[#allocation5 + $0x140] sm:$0xff] %v1985
    %2498 = vst [vmem:[#allocation5 + $0x148] sm:$0xff] %v1986
    %2499 = vst [vmem:[#allocation5 + $0x150] sm:$0xff] %v1987
    %2500 = vst [vmem:[#allocation5 + $0x158] sm:$0xff] %v1988
    %2501 = vst [vmem:[#allocation5 + $0x160] sm:$0xff] %v1989
    %2502 = vst [vmem:[#allocation5 + $0x168] sm:$0xff] %v1990
    %2503 = vst [vmem:[#allocation5 + $0x170] sm:$0xff] %v1991
    %2504 = vst [vmem:[#allocation5 + $0x178] sm:$0xff] %v1992
    %2505 = vst [vmem:[#allocation5 + $0x180] sm:$0xff] %v1993
    %2506 = vst [vmem:[#allocation5 + $0x188] sm:$0xff] %v1994
    %2507 = vst [vmem:[#allocation5 + $0x190] sm:$0xff] %v1995
    %2508 = vst [vmem:[#allocation5 + $0x198] sm:$0xff] %v1996
    %2509 = vst [vmem:[#allocation5 + $0x1a0] sm:$0xff] %v1997
    %2510 = vst [vmem:[#allocation5 + $0x1a8] sm:$0xff] %v1998
    %2511 = vst [vmem:[#allocation5 + $0x1b0] sm:$0xff] %v1999
    %2512 = vst [vmem:[#allocation5 + $0x1b8] sm:$0xff] %v2000
    %2513 = vst [vmem:[#allocation5 + $0x1c0] sm:$0xff] %v2001
    %2514 = vst [vmem:[#allocation5 + $0x1c8] sm:$0xff] %v2002
    %2515 = vst [vmem:[#allocation5 + $0x1d0] sm:$0xff] %v2003
    %2516 = vst [vmem:[#allocation5 + $0x1d8] sm:$0xff] %v2004
    %2517 = vst [vmem:[#allocation5 + $0x1e0] sm:$0xff] %v2005
    %2518 = vst [vmem:[#allocation5 + $0x1e8] sm:$0xff] %v2006
    %2519 = vst [vmem:[#allocation5 + $0x1f0] sm:$0xff] %v2007
    %2520 = vst [vmem:[#allocation5 + $0x1f8] sm:$0xff] %v2008
    %2521 = vst [vmem:[#allocation5 + $0x200] sm:$0xff] %v2009
    %2522 = vst [vmem:[#allocation5 + $0x208] sm:$0xff] %v2010
    %2523 = vst [vmem:[#allocation5 + $0x210] sm:$0xff] %v2011
    %2524 = vst [vmem:[#allocation5 + $0x218] sm:$0xff] %v2012
    %2525 = vst [vmem:[#allocation5 + $0x220] sm:$0xff] %v2013
    %2526 = vst [vmem:[#allocation5 + $0x228] sm:$0xff] %v2014
    %2527 = vst [vmem:[#allocation5 + $0x230] sm:$0xff] %v2015
    %2528 = vst [vmem:[#allocation5 + $0x238] sm:$0xff] %v2016
    %2529 = vst [vmem:[#allocation5 + $0x240] sm:$0xff] %v2017
    %2530 = vst [vmem:[#allocation5 + $0x248] sm:$0xff] %v2018
    %2531 = vst [vmem:[#allocation5 + $0x250] sm:$0xff] %v2019
    %2532 = vst [vmem:[#allocation5 + $0x258] sm:$0xff] %v2020
    %2533 = vst [vmem:[#allocation5 + $0x260] sm:$0xff] %v2021
    %2534 = vst [vmem:[#allocation5 + $0x268] sm:$0xff] %v2022
    %2535 = vst [vmem:[#allocation5 + $0x270] sm:$0xff] %v2023
    %2536 = vst [vmem:[#allocation5 + $0x278] sm:$0xff] %v2024
    %2537 = vst [vmem:[#allocation5 + $0x280] sm:$0xff] %v2025
    %2538 = vst [vmem:[#allocation5 + $0x288] sm:$0xff] %v2026
    %2539 = vst [vmem:[#allocation5 + $0x290] sm:$0xff] %v2027
    %2540 = vst [vmem:[#allocation5 + $0x298] sm:$0xff] %v2028
    %2541 = vst [vmem:[#allocation5 + $0x2a0] sm:$0xff] %v2029
    %2542 = vst [vmem:[#allocation5 + $0x2a8] sm:$0xff] %v2030
    %2543 = vst [vmem:[#allocation5 + $0x2b0] sm:$0xff] %v2031
    %2544 = vst [vmem:[#allocation5 + $0x2b8] sm:$0xff] %v2032
    %2545 = vst [vmem:[#allocation5 + $0x2c0] sm:$0xff] %v2033
    %2546 = vst [vmem:[#allocation5 + $0x2c8] sm:$0xff] %v2034
    %2547 = vst [vmem:[#allocation5 + $0x2d0] sm:$0xff] %v2035
    %2548 = vst [vmem:[#allocation5 + $0x2d8] sm:$0xff] %v2036
    %2549 = vst [vmem:[#allocation5 + $0x2e0] sm:$0xff] %v2037
    %2550 = vst [vmem:[#allocation5 + $0x2e8] sm:$0xff] %v2038
    %2551 = vst [vmem:[#allocation5 + $0x2f0] sm:$0xff] %v2039
    %2552 = vst [vmem:[#allocation5 + $0x2f8] sm:$0xff] %v2040
    %2553 = vst [vmem:[#allocation5 + $0x300] sm:$0xff] %v2041
    %2554 = vst [vmem:[#allocation5 + $0x308] sm:$0xff] %v2042
    %2555 = vst [vmem:[#allocation5 + $0x310] sm:$0xff] %v2043
    %2556 = vst [vmem:[#allocation5 + $0x318] sm:$0xff] %v2044
    %2557 = vst [vmem:[#allocation5 + $0x320] sm:$0xff] %v2045
    %2558 = vst [vmem:[#allocation5 + $0x328] sm:$0xff] %v2046
    %2559 = vst [vmem:[#allocation5 + $0x330] sm:$0xff] %v2047
    %2560 = vst [vmem:[#allocation5 + $0x338] sm:$0xff] %v2048
    %2561 = vst [vmem:[#allocation5 + $0x340] sm:$0xff] %v2049
    %2562 = vst [vmem:[#allocation5 + $0x348] sm:$0xff] %v2050
    %2563 = vst [vmem:[#allocation5 + $0x350] sm:$0xff] %v2051
    %2564 = vst [vmem:[#allocation5 + $0x358] sm:$0xff] %v2052
    %2565 = vst [vmem:[#allocation5 + $0x360] sm:$0xff] %v2053
    %2566 = vst [vmem:[#allocation5 + $0x368] sm:$0xff] %v2054
    %2567 = vst [vmem:[#allocation5 + $0x370] sm:$0xff] %v2055
    %2568 = vst [vmem:[#allocation5 + $0x378] sm:$0xff] %v2056
    %2569 = vst [vmem:[#allocation5 + $0x380] sm:$0xff] %v2057
    %2570 = vst [vmem:[#allocation5 + $0x388] sm:$0xff] %v2058
    %2571 = vst [vmem:[#allocation5 + $0x390] sm:$0xff] %v2059
    %2572 = vst [vmem:[#allocation5 + $0x398] sm:$0xff] %v2060
    %2573 = vst [vmem:[#allocation5 + $0x3a0] sm:$0xff] %v2061
    %2574 = vst [vmem:[#allocation5 + $0x3a8] sm:$0xff] %v2062
    %2575 = vst [vmem:[#allocation5 + $0x3b0] sm:$0xff] %v2063
    %2576 = vst [vmem:[#allocation5 + $0x3b8] sm:$0xff] %v2064
    %2577 = vst [vmem:[#allocation5 + $0x3c0] sm:$0xff] %v2065
    %2578 = vst [vmem:[#allocation5 + $0x3c8] sm:$0xff] %v2066
    %2579 = vst [vmem:[#allocation5 + $0x3d0] sm:$0xff] %v2067
    %2580 = vst [vmem:[#allocation5 + $0x3d8] sm:$0xff] %v2068
    %2581 = vst [vmem:[#allocation5 + $0x3e0] sm:$0xff] %v2069
    %2582 = vst [vmem:[#allocation5 + $0x3e8] sm:$0xff] %v2070
    %2583 = vst [vmem:[#allocation5 + $0x3f0] sm:$0xff] %v2071
    %2584 = vst [vmem:[#allocation5 + $0x3f8] sm:$0xff] %v2072
    %2585 = vst [vmem:[#allocation5 + $0x400] sm:$0xff] %v2073
    %2586 = vst [vmem:[#allocation5 + $0x408] sm:$0xff] %v2074
    %2587 = vst [vmem:[#allocation5 + $0x410] sm:$0xff] %v2075
    %2588 = vst [vmem:[#allocation5 + $0x418] sm:$0xff] %v2076
    %2589 = vst [vmem:[#allocation5 + $0x420] sm:$0xff] %v2077
    %2590 = vst [vmem:[#allocation5 + $0x428] sm:$0xff] %v2078
    %2591 = vst [vmem:[#allocation5 + $0x430] sm:$0xff] %v2079
    %2592 = vst [vmem:[#allocation5 + $0x438] sm:$0xff] %v2080
    %2593 = vst [vmem:[#allocation5 + $0x440] sm:$0xff] %v2081
    %2594 = vst [vmem:[#allocation5 + $0x448] sm:$0xff] %v2082
    %2595 = vst [vmem:[#allocation5 + $0x450] sm:$0xff] %v2083
    %2596 = vst [vmem:[#allocation5 + $0x458] sm:$0xff] %v2084
    %2597 = vst [vmem:[#allocation5 + $0x460] sm:$0xff] %v2085
    %2598 = vst [vmem:[#allocation5 + $0x468] sm:$0xff] %v2086
    %2599 = vst [vmem:[#allocation5 + $0x470] sm:$0xff] %v2087
    %2600 = vst [vmem:[#allocation5 + $0x478] sm:$0xff] %v2088
    %2601 = vst [vmem:[#allocation5 + $0x480] sm:$0xff] %v2089
    %2602 = vst [vmem:[#allocation5 + $0x488] sm:$0xff] %v2090
    %2603 = vst [vmem:[#allocation5 + $0x490] sm:$0xff] %v2091
    %2604 = vst [vmem:[#allocation5 + $0x498] sm:$0xff] %v2092
    %2605 = vst [vmem:[#allocation5 + $0x4a0] sm:$0xff] %v2093
    %2606 = vst [vmem:[#allocation5 + $0x4a8] sm:$0xff] %v2094
    %2607 = vst [vmem:[#allocation5 + $0x4b0] sm:$0xff] %v2095
    %2608 = vst [vmem:[#allocation5 + $0x4b8] sm:$0xff] %v2096
    %2609 = vst [vmem:[#allocation5 + $0x4c0] sm:$0xff] %v2097
    %2610 = vst [vmem:[#allocation5 + $0x4c8] sm:$0xff] %v2098
    %2611 = vst [vmem:[#allocation5 + $0x4d0] sm:$0xff] %v2099
    %2612 = vst [vmem:[#allocation5 + $0x4d8] sm:$0xff] %v2100
    %2613 = vst [vmem:[#allocation5 + $0x4e0] sm:$0xff] %v2101
    %2614 = vst [vmem:[#allocation5 + $0x4e8] sm:$0xff] %v2102
    %2615 = vst [vmem:[#allocation5 + $0x4f0] sm:$0xff] %v2103
    %2616 = vst [vmem:[#allocation5 + $0x4f8] sm:$0xff] %v2104
    %2617 = vst [vmem:[#allocation5 + $0x500] sm:$0xff] %v2105
    %2618 = vst [vmem:[#allocation5 + $0x508] sm:$0xff] %v2106
    %2619 = vst [vmem:[#allocation5 + $0x510] sm:$0xff] %v2107
    %2620 = vst [vmem:[#allocation5 + $0x518] sm:$0xff] %v2108
    %2621 = vst [vmem:[#allocation5 + $0x520] sm:$0xff] %v2109
    %2622 = vst [vmem:[#allocation5 + $0x528] sm:$0xff] %v2110
    %2623 = vst [vmem:[#allocation5 + $0x530] sm:$0xff] %v2111
    %2624 = vst [vmem:[#allocation5 + $0x538] sm:$0xff] %v2112
    %2625 = vst [vmem:[#allocation5 + $0x540] sm:$0xff] %v2113
    %2626 = vst [vmem:[#allocation5 + $0x548] sm:$0xff] %v2114
    %2627 = vst [vmem:[#allocation5 + $0x550] sm:$0xff] %v2115
    %2628 = vst [vmem:[#allocation5 + $0x558] sm:$0xff] %v2116
    %2629 = vst [vmem:[#allocation5 + $0x560] sm:$0xff] %v2117
    %2630 = vst [vmem:[#allocation5 + $0x568] sm:$0xff] %v2118
    %2631 = vst [vmem:[#allocation5 + $0x570] sm:$0xff] %v2119
    %2632 = vst [vmem:[#allocation5 + $0x578] sm:$0xff] %v2120
    %2633 = vst [vmem:[#allocation5 + $0x580] sm:$0xff] %v2121
    %2634 = vst [vmem:[#allocation5 + $0x588] sm:$0xff] %v2122
    %2635 = vst [vmem:[#allocation5 + $0x590] sm:$0xff] %v2123
    %2636 = vst [vmem:[#allocation5 + $0x598] sm:$0xff] %v2124
    %2637 = vst [vmem:[#allocation5 + $0x5a0] sm:$0xff] %v2125
    %2638 = vst [vmem:[#allocation5 + $0x5a8] sm:$0xff] %v2126
    %2639 = vst [vmem:[#allocation5 + $0x5b0] sm:$0xff] %v2127
    %2640 = vst [vmem:[#allocation5 + $0x5b8] sm:$0xff] %v2128
    %2641 = vst [vmem:[#allocation5 + $0x5c0] sm:$0xff] %v2129
    %2642 = vst [vmem:[#allocation5 + $0x5c8] sm:$0xff] %v2130
    %2643 = vst [vmem:[#allocation5 + $0x5d0] sm:$0xff] %v2131
    %2644 = vst [vmem:[#allocation5 + $0x5d8] sm:$0xff] %v2132
    %2645 = vst [vmem:[#allocation5 + $0x5e0] sm:$0xff] %v2133
    %2646 = vst [vmem:[#allocation5 + $0x5e8] sm:$0xff] %v2134
    %2647 = vst [vmem:[#allocation5 + $0x5f0] sm:$0xff] %v2135
    %2648 = vst [vmem:[#allocation5 + $0x5f8] sm:$0xff] %v2136
    %2649 = vst [vmem:[#allocation5 + $0x600] sm:$0xff] %v2137
    %2650 = vst [vmem:[#allocation5 + $0x608] sm:$0xff] %v2138
    %2651 = vst [vmem:[#allocation5 + $0x610] sm:$0xff] %v2139
    %2652 = vst [vmem:[#allocation5 + $0x618] sm:$0xff] %v2140
    %2653 = vst [vmem:[#allocation5 + $0x620] sm:$0xff] %v2141
    %2654 = vst [vmem:[#allocation5 + $0x628] sm:$0xff] %v2142
    %2655 = vst [vmem:[#allocation5 + $0x630] sm:$0xff] %v2143
    %2656 = vst [vmem:[#allocation5 + $0x638] sm:$0xff] %v2144
    %2657 = vst [vmem:[#allocation5 + $0x640] sm:$0xff] %v2145
    %2658 = vst [vmem:[#allocation5 + $0x648] sm:$0xff] %v2146
    %2659 = vst [vmem:[#allocation5 + $0x650] sm:$0xff] %v2147
    %2660 = vst [vmem:[#allocation5 + $0x658] sm:$0xff] %v2148
    %2661 = vst [vmem:[#allocation5 + $0x660] sm:$0xff] %v2149
    %2662 = vst [vmem:[#allocation5 + $0x668] sm:$0xff] %v2150
    %2663 = vst [vmem:[#allocation5 + $0x670] sm:$0xff] %v2151
    %2664 = vst [vmem:[#allocation5 + $0x678] sm:$0xff] %v2152
    %2665 = vst [vmem:[#allocation5 + $0x680] sm:$0xff] %v2153
    %2666 = vst [vmem:[#allocation5 + $0x688] sm:$0xff] %v2154
    %2667 = vst [vmem:[#allocation5 + $0x690] sm:$0xff] %v2155
    %2668 = vst [vmem:[#allocation5 + $0x698] sm:$0xff] %v2156
    %2669 = vst [vmem:[#allocation5 + $0x6a0] sm:$0xff] %v2157
    %2670 = vst [vmem:[#allocation5 + $0x6a8] sm:$0xff] %v2158
    %2671 = vst [vmem:[#allocation5 + $0x6b0] sm:$0xff] %v2159
    %2672 = vst [vmem:[#allocation5 + $0x6b8] sm:$0xff] %v2160
    %2673 = vst [vmem:[#allocation5 + $0x6c0] sm:$0xff] %v2161
    %2674 = vst [vmem:[#allocation5 + $0x6c8] sm:$0xff] %v2162
    %2675 = vst [vmem:[#allocation5 + $0x6d0] sm:$0xff] %v2163
    %2676 = vst [vmem:[#allocation5 + $0x6d8] sm:$0xff] %v2164
    %2677 = vst [vmem:[#allocation5 + $0x6e0] sm:$0xff] %v2165
    %2678 = vst [vmem:[#allocation5 + $0x6e8] sm:$0xff] %v2166
    %2679 = vst [vmem:[#allocation5 + $0x6f0] sm:$0xff] %v2167
    %2680 = vst [vmem:[#allocation5 + $0x6f8] sm:$0xff] %v2168
    %2681 = vst [vmem:[#allocation5 + $0x700] sm:$0xff] %v2169
    %2682 = vst [vmem:[#allocation5 + $0x708] sm:$0xff] %v2170
    %2683 = vst [vmem:[#allocation5 + $0x710] sm:$0xff] %v2171
    %2684 = vst [vmem:[#allocation5 + $0x718] sm:$0xff] %v2172
    %2685 = vst [vmem:[#allocation5 + $0x720] sm:$0xff] %v2173
    %2686 = vst [vmem:[#allocation5 + $0x728] sm:$0xff] %v2174
    %2687 = vst [vmem:[#allocation5 + $0x730] sm:$0xff] %v2175
    %2688 = vst [vmem:[#allocation5 + $0x738] sm:$0xff] %v2176
    %2689 = vst [vmem:[#allocation5 + $0x740] sm:$0xff] %v2177
    %2690 = vst [vmem:[#allocation5 + $0x748] sm:$0xff] %v2178
    %2691 = vst [vmem:[#allocation5 + $0x750] sm:$0xff] %v2179
    %2692 = vst [vmem:[#allocation5 + $0x758] sm:$0xff] %v2180
    %2693 = vst [vmem:[#allocation5 + $0x760] sm:$0xff] %v2181
    %2694 = vst [vmem:[#allocation5 + $0x768] sm:$0xff] %v2182
    %2695 = vst [vmem:[#allocation5 + $0x770] sm:$0xff] %v2183
    %2696 = vst [vmem:[#allocation5 + $0x778] sm:$0xff] %v2184
    %2697 = vst [vmem:[#allocation5 + $0x780] sm:$0xff] %v2185
    %2698 = vst [vmem:[#allocation5 + $0x788] sm:$0xff] %v2186
    %2699 = vst [vmem:[#allocation5 + $0x790] sm:$0xff] %v2187
    %2700 = vst [vmem:[#allocation5 + $0x798] sm:$0xff] %v2188
    %2701 = vst [vmem:[#allocation5 + $0x7a0] sm:$0xff] %v2189
    %2702 = vst [vmem:[#allocation5 + $0x7a8] sm:$0xff] %v2190
    %2703 = vst [vmem:[#allocation5 + $0x7b0] sm:$0xff] %v2191
    %2704 = vst [vmem:[#allocation5 + $0x7b8] sm:$0xff] %v2192
    %2705 = vst [vmem:[#allocation5 + $0x7c0] sm:$0xff] %v2193
    %2706 = vst [vmem:[#allocation5 + $0x7c8] sm:$0xff] %v2194
    %2707 = vst [vmem:[#allocation5 + $0x7d0] sm:$0xff] %v2195
    %2708 = vst [vmem:[#allocation5 + $0x7d8] sm:$0xff] %v2196
    %2709 = vst [vmem:[#allocation5 + $0x7e0] sm:$0xff] %v2197
    %2710 = vst [vmem:[#allocation5 + $0x7e8] sm:$0xff] %v2198
    %2711 = vst [vmem:[#allocation5 + $0x7f0] sm:$0xff] %v2199
    %2712 = vst [vmem:[#allocation5 + $0x7f8] sm:$0xff] %v2200
    %2713 = vst [vmem:[#allocation5 + $0x800] sm:$0xff] %v2201
    %2714 = vst [vmem:[#allocation5 + $0x808] sm:$0xff] %v2202
    %2715 = vst [vmem:[#allocation5 + $0x810] sm:$0xff] %v2203
    %2716 = vst [vmem:[#allocation5 + $0x818] sm:$0xff] %v2204
    %2717 = vst [vmem:[#allocation5 + $0x820] sm:$0xff] %v2205
    %2718 = vst [vmem:[#allocation5 + $0x828] sm:$0xff] %v2206
    %2719 = vst [vmem:[#allocation5 + $0x830] sm:$0xff] %v2207
    %2720 = vst [vmem:[#allocation5 + $0x838] sm:$0xff] %v2208
    %2721 = vst [vmem:[#allocation5 + $0x840] sm:$0xff] %v2209
    %2722 = vst [vmem:[#allocation5 + $0x848] sm:$0xff] %v2210
    %2723 = vst [vmem:[#allocation5 + $0x850] sm:$0xff] %v2211
    %2724 = vst [vmem:[#allocation5 + $0x858] sm:$0xff] %v2212
    %2725 = vst [vmem:[#allocation5 + $0x860] sm:$0xff] %v2213
    %2726 = vst [vmem:[#allocation5 + $0x868] sm:$0xff] %v2214
    %2727 = vst [vmem:[#allocation5 + $0x870] sm:$0xff] %v2215
    %2728 = vst [vmem:[#allocation5 + $0x878] sm:$0xff] %v2216
    %2729 = vst [vmem:[#allocation5 + $0x880] sm:$0xff] %v2217
    %2730 = vst [vmem:[#allocation5 + $0x888] sm:$0xff] %v2218
    %2731 = vst [vmem:[#allocation5 + $0x890] sm:$0xff] %v2219
    %2732 = vst [vmem:[#allocation5 + $0x898] sm:$0xff] %v2220
    %2733 = vst [vmem:[#allocation5 + $0x8a0] sm:$0xff] %v2221
    %2734 = vst [vmem:[#allocation5 + $0x8a8] sm:$0xff] %v2222
    %2735 = vst [vmem:[#allocation5 + $0x8b0] sm:$0xff] %v2223
    %2736 = vst [vmem:[#allocation5 + $0x8b8] sm:$0xff] %v2224
    %2737 = vst [vmem:[#allocation5 + $0x8c0] sm:$0xff] %v2225
    %2738 = vst [vmem:[#allocation5 + $0x8c8] sm:$0xff] %v2226
    %2739 = vst [vmem:[#allocation5 + $0x8d0] sm:$0xff] %v2227
    %2740 = vst [vmem:[#allocation5 + $0x8d8] sm:$0xff] %v2228
    %2741 = vst [vmem:[#allocation5 + $0x8e0] sm:$0xff] %v2229
    %2742 = vst [vmem:[#allocation5 + $0x8e8] sm:$0xff] %v2230
    %2743 = vst [vmem:[#allocation5 + $0x8f0] sm:$0xff] %v2231
    %2744 = vst [vmem:[#allocation5 + $0x8f8] sm:$0xff] %v2232
    %2745 = vst [vmem:[#allocation5 + $0x900] sm:$0xff] %v2233
    %2746 = vst [vmem:[#allocation5 + $0x908] sm:$0xff] %v2234
    %2747 = vst [vmem:[#allocation5 + $0x910] sm:$0xff] %v2235
    %2748 = vst [vmem:[#allocation5 + $0x918] sm:$0xff] %v2236
    %2749 = vst [vmem:[#allocation5 + $0x920] sm:$0xff] %v2237
    %2750 = vst [vmem:[#allocation5 + $0x928] sm:$0xff] %v2238
    %2751 = vst [vmem:[#allocation5 + $0x930] sm:$0xff] %v2239
    %2752 = vst [vmem:[#allocation5 + $0x938] sm:$0xff] %v2240
    %2753 = vst [vmem:[#allocation5 + $0x940] sm:$0xff] %v2241
    %2754 = vst [vmem:[#allocation5 + $0x948] sm:$0xff] %v2242
    %2755 = vst [vmem:[#allocation5 + $0x950] sm:$0xff] %v2243
    %2756 = vst [vmem:[#allocation5 + $0x958] sm:$0xff] %v2244
    %2757 = vst [vmem:[#allocation5 + $0x960] sm:$0xff] %v2245
    %2758 = vst [vmem:[#allocation5 + $0x968] sm:$0xff] %v2246
    %2759 = vst [vmem:[#allocation5 + $0x970] sm:$0xff] %v2247
    %2760 = vst [vmem:[#allocation5 + $0x978] sm:$0xff] %v2248
    %2761 = vst [vmem:[#allocation5 + $0x980] sm:$0xff] %v2249
    %2762 = vst [vmem:[#allocation5 + $0x988] sm:$0xff] %v2250
    %2763 = vst [vmem:[#allocation5 + $0x990] sm:$0xff] %v2251
    %2764 = vst [vmem:[#allocation5 + $0x998] sm:$0xff] %v2252
    %2765 = vst [vmem:[#allocation5 + $0x9a0] sm:$0xff] %v2253
    %2766 = vst [vmem:[#allocation5 + $0x9a8] sm:$0xff] %v2254
    %2767 = vst [vmem:[#allocation5 + $0x9b0] sm:$0xff] %v2255
    %2768 = vst [vmem:[#allocation5 + $0x9b8] sm:$0xff] %v2256
    %2769 = vst [vmem:[#allocation5 + $0x9c0] sm:$0xff] %v2257
    %2770 = vst [vmem:[#allocation5 + $0x9c8] sm:$0xff] %v2258
    %2771 = vst [vmem:[#allocation5 + $0x9d0] sm:$0xff] %v2259
    %2772 = vst [vmem:[#allocation5 + $0x9d8] sm:$0xff] %v2260
    %2773 = vst [vmem:[#allocation5 + $0x9e0] sm:$0xff] %v2261
    %2774 = vst [vmem:[#allocation5 + $0x9e8] sm:$0xff] %v2262
    %2775 = vst [vmem:[#allocation5 + $0x9f0] sm:$0xff] %v2263
    %2776 = vst [vmem:[#allocation5 + $0x9f8] sm:$0xff] %v2264
    %2777 = vst [vmem:[#allocation5 + $0xa00] sm:$0xff] %v2265
    %2778 = vst [vmem:[#allocation5 + $0xa08] sm:$0xff] %v2266
    %2779 = vst [vmem:[#allocation5 + $0xa10] sm:$0xff] %v2267
    %2780 = vst [vmem:[#allocation5 + $0xa18] sm:$0xff] %v2268
    %2781 = vst [vmem:[#allocation5 + $0xa20] sm:$0xff] %v2269
    %2782 = vst [vmem:[#allocation5 + $0xa28] sm:$0xff] %v2270
    %2783 = vst [vmem:[#allocation5 + $0xa30] sm:$0xff] %v2271
    %2784 = vst [vmem:[#allocation5 + $0xa38] sm:$0xff] %v2272
    %2785 = vst [vmem:[#allocation5 + $0xa40] sm:$0xff] %v2273
    %2786 = vst [vmem:[#allocation5 + $0xa48] sm:$0xff] %v2274
    %2787 = vst [vmem:[#allocation5 + $0xa50] sm:$0xff] %v2275
    %2788 = vst [vmem:[#allocation5 + $0xa58] sm:$0xff] %v2276
    %2789 = vst [vmem:[#allocation5 + $0xa60] sm:$0xff] %v2277
    %2790 = vst [vmem:[#allocation5 + $0xa68] sm:$0xff] %v2278
    %2791 = vst [vmem:[#allocation5 + $0xa70] sm:$0xff] %v2279
    %2792 = vst [vmem:[#allocation5 + $0xa78] sm:$0xff] %v2280
    %2793 = vst [vmem:[#allocation5 + $0xa80] sm:$0xff] %v2281
    %2794 = vst [vmem:[#allocation5 + $0xa88] sm:$0xff] %v2282
    %2795 = vst [vmem:[#allocation5 + $0xa90] sm:$0xff] %v2283
    %2796 = vst [vmem:[#allocation5 + $0xa98] sm:$0xff] %v2284
    %2797 = vst [vmem:[#allocation5 + $0xaa0] sm:$0xff] %v2285
    %2798 = vst [vmem:[#allocation5 + $0xaa8] sm:$0xff] %v2286
    %2799 = vst [vmem:[#allocation5 + $0xab0] sm:$0xff] %v2287
    %2800 = vst [vmem:[#allocation5 + $0xab8] sm:$0xff] %v2288
    %2801 = vst [vmem:[#allocation5 + $0xac0] sm:$0xff] %v2289
    %2802 = vst [vmem:[#allocation5 + $0xac8] sm:$0xff] %v2290
    %2803 = vst [vmem:[#allocation5 + $0xad0] sm:$0xff] %v2291
    %2804 = vst [vmem:[#allocation5 + $0xad8] sm:$0xff] %v2292
    %2805 = vst [vmem:[#allocation5 + $0xae0] sm:$0xff] %v2293
    %2806 = vst [vmem:[#allocation5 + $0xae8] sm:$0xff] %v2294
    %2807 = vst [vmem:[#allocation5 + $0xaf0] sm:$0xff] %v2295
    %2808 = vst [vmem:[#allocation5 + $0xaf8] sm:$0xff] %v2296
    %2809 = vst [vmem:[#allocation5 + $0xb00] sm:$0xff] %v2297
    %2810 = vst [vmem:[#allocation5 + $0xb08] sm:$0xff] %v2298
    %2811 = vst [vmem:[#allocation5 + $0xb10] sm:$0xff] %v2299
    %2812 = vst [vmem:[#allocation5 + $0xb18] sm:$0xff] %v2300
    %2813 = vst [vmem:[#allocation5 + $0xb20] sm:$0xff] %v2301
    %2814 = vst [vmem:[#allocation5 + $0xb28] sm:$0xff] %v2302
    %2815 = vst [vmem:[#allocation5 + $0xb30] sm:$0xff] %v2303
    %2816 = vst [vmem:[#allocation5 + $0xb38] sm:$0xff] %v2304
    %2817 = vst [vmem:[#allocation5 + $0xb40] sm:$0xff] %v2305
    %2818 = vst [vmem:[#allocation5 + $0xb48] sm:$0xff] %v2306
    %2819 = vst [vmem:[#allocation5 + $0xb50] sm:$0xff] %v2307
    %2820 = vst [vmem:[#allocation5 + $0xb58] sm:$0xff] %v2308
    %2821 = vst [vmem:[#allocation5 + $0xb60] sm:$0xff] %v2309
    %2822 = vst [vmem:[#allocation5 + $0xb68] sm:$0xff] %v2310
    %2823 = vst [vmem:[#allocation5 + $0xb70] sm:$0xff] %v2311
    %2824 = vst [vmem:[#allocation5 + $0xb78] sm:$0xff] %v2312
    %2825 = vst [vmem:[#allocation5 + $0xb80] sm:$0xff] %v2313
    %2826 = vst [vmem:[#allocation5 + $0xb88] sm:$0xff] %v2314
    %2827 = vst [vmem:[#allocation5 + $0xb90] sm:$0xff] %v2315
    %2828 = vst [vmem:[#allocation5 + $0xb98] sm:$0xff] %v2316
    %2829 = vst [vmem:[#allocation5 + $0xba0] sm:$0xff] %v2317
    %2830 = vst [vmem:[#allocation5 + $0xba8] sm:$0xff] %v2318
    %2831 = vst [vmem:[#allocation5 + $0xbb0] sm:$0xff] %v2319
    %2832 = vst [vmem:[#allocation5 + $0xbb8] sm:$0xff] %v2320
    %2833 = vst [vmem:[#allocation5 + $0xbc0] sm:$0xff] %v2321
    %2834 = vst [vmem:[#allocation5 + $0xbc8] sm:$0xff] %v2322
    %2835 = vst [vmem:[#allocation5 + $0xbd0] sm:$0xff] %v2323
    %2836 = vst [vmem:[#allocation5 + $0xbd8] sm:$0xff] %v2324
    %2837 = vst [vmem:[#allocation5 + $0xbe0] sm:$0xff] %v2325
    %2838 = vst [vmem:[#allocation5 + $0xbe8] sm:$0xff] %v2326
    %2839 = vst [vmem:[#allocation5 + $0xbf0] sm:$0xff] %v2327
    %2840 = vst [vmem:[#allocation5 + $0xbf8] sm:$0xff] %v2328
    %2841 = vst [vmem:[#allocation5 + $0xc00] sm:$0xff] %v2329
    %2842 = vst [vmem:[#allocation5 + $0xc08] sm:$0xff] %v2330
    %2843 = vst [vmem:[#allocation5 + $0xc10] sm:$0xff] %v2331
    %2844 = vst [vmem:[#allocation5 + $0xc18] sm:$0xff] %v2332
    %2845 = vst [vmem:[#allocation5 + $0xc20] sm:$0xff] %v2333
    %2846 = vst [vmem:[#allocation5 + $0xc28] sm:$0xff] %v2334
    %2847 = vst [vmem:[#allocation5 + $0xc30] sm:$0xff] %v2335
    %2848 = vst [vmem:[#allocation5 + $0xc38] sm:$0xff] %v2336
    %2849 = vst [vmem:[#allocation5 + $0xc40] sm:$0xff] %v2337
    %2850 = vst [vmem:[#allocation5 + $0xc48] sm:$0xff] %v2338
    %2851 = vst [vmem:[#allocation5 + $0xc50] sm:$0xff] %v2339
    %2852 = vst [vmem:[#allocation5 + $0xc58] sm:$0xff] %v2340
    %2853 = vst [vmem:[#allocation5 + $0xc60] sm:$0xff] %v2341
    %2854 = vst [vmem:[#allocation5 + $0xc68] sm:$0xff] %v2342
    %2855 = vst [vmem:[#allocation5 + $0xc70] sm:$0xff] %v2343
    %2856 = vst [vmem:[#allocation5 + $0xc78] sm:$0xff] %v2344
    %2857 = vst [vmem:[#allocation5 + $0xc80] sm:$0xff] %v2345
    %2858 = vst [vmem:[#allocation5 + $0xc88] sm:$0xff] %v2346
    %2859 = vst [vmem:[#allocation5 + $0xc90] sm:$0xff] %v2347
    %2860 = vst [vmem:[#allocation5 + $0xc98] sm:$0xff] %v2348
    %2861 = vst [vmem:[#allocation5 + $0xca0] sm:$0xff] %v2349
    %2862 = vst [vmem:[#allocation5 + $0xca8] sm:$0xff] %v2350
    %2863 = vst [vmem:[#allocation5 + $0xcb0] sm:$0xff] %v2351
    %2864 = vst [vmem:[#allocation5 + $0xcb8] sm:$0xff] %v2352
    %2865 = vst [vmem:[#allocation5 + $0xcc0] sm:$0xff] %v2353
    %2866 = vst [vmem:[#allocation5 + $0xcc8] sm:$0xff] %v2354
    %2867 = vst [vmem:[#allocation5 + $0xcd0] sm:$0xff] %v2355
    %2868 = vst [vmem:[#allocation5 + $0xcd8] sm:$0xff] %v2356
    %2869 = vst [vmem:[#allocation5 + $0xce0] sm:$0xff] %v2357
    %2870 = vst [vmem:[#allocation5 + $0xce8] sm:$0xff] %v2358
    %2871 = vst [vmem:[#allocation5 + $0xcf0] sm:$0xff] %v2359
    %2872 = vst [vmem:[#allocation5 + $0xcf8] sm:$0xff] %v2360
    %2873 = vst [vmem:[#allocation5 + $0xd00] sm:$0xff] %v2361
    %2874 = vst [vmem:[#allocation5 + $0xd08] sm:$0xff] %v2362
    %2875 = vst [vmem:[#allocation5 + $0xd10] sm:$0xff] %v2363
    %2876 = vst [vmem:[#allocation5 + $0xd18] sm:$0xff] %v2364
    %2877 = vst [vmem:[#allocation5 + $0xd20] sm:$0xff] %v2365
    %2878 = vst [vmem:[#allocation5 + $0xd28] sm:$0xff] %v2366
    %2879 = vst [vmem:[#allocation5 + $0xd30] sm:$0xff] %v2367
    %2880 = vst [vmem:[#allocation5 + $0xd38] sm:$0xff] %v2368
    %2881 = vst [vmem:[#allocation5 + $0xd40] sm:$0xff] %v2369
    %2882 = vst [vmem:[#allocation5 + $0xd48] sm:$0xff] %v2370
    %2883 = vst [vmem:[#allocation5 + $0xd50] sm:$0xff] %v2371
    %2884 = vst [vmem:[#allocation5 + $0xd58] sm:$0xff] %v2372
    %2885 = vst [vmem:[#allocation5 + $0xd60] sm:$0xff] %v2373
    %2886 = vst [vmem:[#allocation5 + $0xd68] sm:$0xff] %v2374
    %2887 = vst [vmem:[#allocation5 + $0xd70] sm:$0xff] %v2375
    %2888 = vst [vmem:[#allocation5 + $0xd78] sm:$0xff] %v2376
    %2889 = vst [vmem:[#allocation5 + $0xd80] sm:$0xff] %v2377
    %2890 = vst [vmem:[#allocation5 + $0xd88] sm:$0xff] %v2378
    %2891 = vst [vmem:[#allocation5 + $0xd90] sm:$0xff] %v2379
    %2892 = vst [vmem:[#allocation5 + $0xd98] sm:$0xff] %v2380
    %2893 = vst [vmem:[#allocation5 + $0xda0] sm:$0xff] %v2381
    %2894 = vst [vmem:[#allocation5 + $0xda8] sm:$0xff] %v2382
    %2895 = vst [vmem:[#allocation5 + $0xdb0] sm:$0xff] %v2383
    %2896 = vst [vmem:[#allocation5 + $0xdb8] sm:$0xff] %v2384
    %2897 = vst [vmem:[#allocation5 + $0xdc0] sm:$0xff] %v2385
    %2898 = vst [vmem:[#allocation5 + $0xdc8] sm:$0xff] %v2386
    %2899 = vst [vmem:[#allocation5 + $0xdd0] sm:$0xff] %v2387
    %2900 = vst [vmem:[#allocation5 + $0xdd8] sm:$0xff] %v2388
    %2901 = vst [vmem:[#allocation5 + $0xde0] sm:$0xff] %v2389
    %2902 = vst [vmem:[#allocation5 + $0xde8] sm:$0xff] %v2390
    %2903 = vst [vmem:[#allocation5 + $0xdf0] sm:$0xff] %v2391
    %2904 = vst [vmem:[#allocation5 + $0xdf8] sm:$0xff] %v2392
    %2905 = vst [vmem:[#allocation5 + $0xe00] sm:$0xff] %v2393
    %2906 = vst [vmem:[#allocation5 + $0xe08] sm:$0xff] %v2394
    %2907 = vst [vmem:[#allocation5 + $0xe10] sm:$0xff] %v2395
    %2908 = vst [vmem:[#allocation5 + $0xe18] sm:$0xff] %v2396
    %2909 = vst [vmem:[#allocation5 + $0xe20] sm:$0xff] %v2397
    %2910 = vst [vmem:[#allocation5 + $0xe28] sm:$0xff] %v2398
    %2911 = vst [vmem:[#allocation5 + $0xe30] sm:$0xff] %v2399
    %2912 = vst [vmem:[#allocation5 + $0xe38] sm:$0xff] %v2400
    %2913 = vst [vmem:[#allocation5 + $0xe40] sm:$0xff] %v2401
    %2914 = vst [vmem:[#allocation5 + $0xe48] sm:$0xff] %v2402
    %2915 = vst [vmem:[#allocation5 + $0xe50] sm:$0xff] %v2403
    %2916 = vst [vmem:[#allocation5 + $0xe58] sm:$0xff] %v2404
    %2917 = vst [vmem:[#allocation5 + $0xe60] sm:$0xff] %v2405
    %2918 = vst [vmem:[#allocation5 + $0xe68] sm:$0xff] %v2406
    %2919 = vst [vmem:[#allocation5 + $0xe70] sm:$0xff] %v2407
    %2920 = vst [vmem:[#allocation5 + $0xe78] sm:$0xff] %v2408
    %2921 = vst [vmem:[#allocation5 + $0xe80] sm:$0xff] %v2409
    %2922 = vst [vmem:[#allocation5 + $0xe88] sm:$0xff] %v2410
    %2923 = vst [vmem:[#allocation5 + $0xe90] sm:$0xff] %v2411
    %2924 = vst [vmem:[#allocation5 + $0xe98] sm:$0xff] %v2412
    %2925 = vst [vmem:[#allocation5 + $0xea0] sm:$0xff] %v2413
    %2926 = vst [vmem:[#allocation5 + $0xea8] sm:$0xff] %v2414
    %2927 = vst [vmem:[#allocation5 + $0xeb0] sm:$0xff] %v2415
    %2928 = vst [vmem:[#allocation5 + $0xeb8] sm:$0xff] %v2416
    %2929 = vst [vmem:[#allocation5 + $0xec0] sm:$0xff] %v2417
    %2930 = vst [vmem:[#allocation5 + $0xec8] sm:$0xff] %v2418
    %2931 = vst [vmem:[#allocation5 + $0xed0] sm:$0xff] %v2419
    %2932 = vst [vmem:[#allocation5 + $0xed8] sm:$0xff] %v2420
    %2933 = vst [vmem:[#allocation5 + $0xee0] sm:$0xff] %v2421
    %2934 = vst [vmem:[#allocation5 + $0xee8] sm:$0xff] %v2422
    %2935 = vst [vmem:[#allocation5 + $0xef0] sm:$0xff] %v2423
    %2936 = vst [vmem:[#allocation5 + $0xef8] sm:$0xff] %v2424
    %2937 = vst [vmem:[#allocation5 + $0xf00] sm:$0xff] %v2425
    %2938 = vst [vmem:[#allocation5 + $0xf08] sm:$0xff] %v2426
    %2939 = vst [vmem:[#allocation5 + $0xf10] sm:$0xff] %v2427
    %2940 = vst [vmem:[#allocation5 + $0xf18] sm:$0xff] %v2428
    %2941 = vst [vmem:[#allocation5 + $0xf20] sm:$0xff] %v2429
    %2942 = vst [vmem:[#allocation5 + $0xf28] sm:$0xff] %v2430
    %2943 = vst [vmem:[#allocation5 + $0xf30] sm:$0xff] %v2431
    %2944 = vst [vmem:[#allocation5 + $0xf38] sm:$0xff] %v2432
    %2945 = vst [vmem:[#allocation5 + $0xf40] sm:$0xff] %v2433
    %2946 = vst [vmem:[#allocation5 + $0xf48] sm:$0xff] %v2434
    %2947 = vst [vmem:[#allocation5 + $0xf50] sm:$0xff] %v2435
    %2948 = vst [vmem:[#allocation5 + $0xf58] sm:$0xff] %v2436
    %2949 = vst [vmem:[#allocation5 + $0xf60] sm:$0xff] %v2437
    %2950 = vst [vmem:[#allocation5 + $0xf68] sm:$0xff] %v2438
    %2951 = vst [vmem:[#allocation5 + $0xf70] sm:$0xff] %v2439
    %2952 = vst [vmem:[#allocation5 + $0xf78] sm:$0xff] %v2440
    %2953 = vst [vmem:[#allocation5 + $0xf80] sm:$0xff] %v2441
    %2954 = vst [vmem:[#allocation5 + $0xf88] sm:$0xff] %v2442
    %2955 = vst [vmem:[#allocation5 + $0xf90] sm:$0xff] %v2443
    %2956 = vst [vmem:[#allocation5 + $0xf98] sm:$0xff] %v2444
    %2957 = vst [vmem:[#allocation5 + $0xfa0] sm:$0xff] %v2445
    %2958 = vst [vmem:[#allocation5 + $0xfa8] sm:$0xff] %v2446
    %2959 = vst [vmem:[#allocation5 + $0xfb0] sm:$0xff] %v2447
    %2960 = vst [vmem:[#allocation5 + $0xfb8] sm:$0xff] %v2448
    %2961 = vst [vmem:[#allocation5 + $0xfc0] sm:$0xff] %v2449
    %2962 = vst [vmem:[#allocation5 + $0xfc8] sm:$0xff] %v2450
    %2963 = vst [vmem:[#allocation5 + $0xfd0] sm:$0xff] %v2451
    %2964 = vst [vmem:[#allocation5 + $0xfd8] sm:$0xff] %v2452
    %2965 = vst [vmem:[#allocation5 + $0xfe0] sm:$0xff] %v2453
    %2966 = vst [vmem:[#allocation5 + $0xfe8] sm:$0xff] %v2454
    %2967 = vst [vmem:[#allocation5 + $0xff0] sm:$0xff] %v2455
    %2968 = vst [vmem:[#allocation5 + $0xff8] sm:$0xff] %v2456
    // Predicated region
    $region26: #{_periodic_pallas.1} parent=1 // pred_check
      _
    $region27: #{_periodic_pallas.1} parent=1 // pred_check_branch
      %2970 = sbr.rel (0) target = $region29
    $region28: #{_periodic_pallas.1} parent=1 // pred_region
      %s2972 = ssub.s32 65536, 65536
      %2973 = vsyncadd [#allocation4], %s2972
      %s2974 = sshll.u32 [#allocation5], 4
      %s2975 = int_to_ptr.vmem [resolvable:$true] %s2974
      %2980 = dma.vmem_to_hbm [thread:$0]  %s2975, 65536, %s5, [#allocation4], 128, 128, 8
    $region29: #{_periodic_pallas.1} parent=1 // pred_fallthru
      _
    // Predicated region
    $region30: #{_periodic_pallas.1} parent=1 // pred_check
      _
    $region31: #{_periodic_pallas.1} parent=1 // pred_check_branch
      %2982 = sbr.rel (0) target = $region33
    $region32: #{_periodic_pallas.1} parent=1 // pred_region
      %2983 = dma.done [#allocation4], 65536
    $region33: #{_periodic_pallas.1} parent=1 // pred_fallthru
      _
    %2984 = vsyncpa [#allocation3], 1
    %2985 = vsyncpa [#allocation4], 1

</llo_original>
